<compile_context>
chip_gen: v7x
topology: tpu7x:2x2x1
jax: 0.10.0
libtpu: 0.0.40
codegen_flags: <defaults>
</compile_context>

<pallas_src>
import jax
import jax.numpy as jnp
from jax import lax
from jax.experimental import pallas as pl
from jax.experimental.pallas import tpu as pltpu


def detector_rnn_kernel(
    w1_ref, w2_ref, h0_ref,                       # (Tc,B,H), (Tc,B,H), (B,H)
    W1t_ref, b1_ref, W2t_ref, b2_ref,             # input projections
    Wih1t_ref, Wih2t_ref, bih_ref,                # GRU input weights (concat-free split)
    Whht_ref, bhh_ref,                            # GRU hidden weights
    w3_ref, b3_ref,                               # detector head (row vector, scalar bias)
    score_ref, hout_ref,                          # outputs: (Tc,B) scores, (B,H) hidden
    gi_scr, h_all_scr,                            # VMEM scratch: (Tc,B,3H), (Tc,B,H)
):
    c = pl.program_id(0)
    Tc, B, H = h_all_scr.shape

    @pl.when(c == 0)
    def _():
        # Hidden state lives in the resident output block across all time chunks.
        hout_ref[...] = h0_ref[...].astype(jnp.float32)

    # ---- Phase 1 (parallel over the whole chunk): input projections + GRU input gates.
    w1_2d = w1_ref[...].reshape(Tc * B, H)
    w2_2d = w2_ref[...].reshape(Tc * B, H)
    a1 = jnp.maximum(
        jnp.dot(w1_2d, W1t_ref[...], preferred_element_type=jnp.float32) + b1_ref[...], 0.0)
    a2 = jnp.maximum(
        jnp.dot(w2_2d, W2t_ref[...], preferred_element_type=jnp.float32) + b2_ref[...], 0.0)
    gi = (jnp.dot(a1, Wih1t_ref[...], preferred_element_type=jnp.float32)
          + jnp.dot(a2, Wih2t_ref[...], preferred_element_type=jnp.float32)
          + bih_ref[...])                                           # (Tc*B, 3H)
    gi_scr[...] = gi.reshape(Tc, B, 3 * H)

    # ---- Phase 2 (serial recurrence): only gh matmul + gate epilogue per step.
    Whht = Whht_ref[...]                                            # hoisted loads
    bhh = jnp.broadcast_to(bhh_ref[...], (B, 3 * H))                # hoisted broadcast

    def step(t, h):
        gi_t = gi_scr[t]                                            # (B, 3H)
        gh = jnp.dot(h, Whht, preferred_element_type=jnp.float32) + bhh
        r = lax.logistic(gi_t[:, 0:H] + gh[:, 0:H])
        z = lax.logistic(gi_t[:, H:2 * H] + gh[:, H:2 * H])
        n = jnp.tanh(gi_t[:, 2 * H:3 * H] + r * gh[:, 2 * H:3 * H])
        h_new = (1.0 - z) * n + z * h
        h_all_scr[t] = h_new                                        # stash for the head
        return h_new

    h_final = lax.fori_loop(0, Tc, step, hout_ref[...], unroll=True)
    hout_ref[...] = h_final.astype(hout_ref.dtype)

    # ---- Phase 3 (parallel): detector head for the whole chunk, one lane-dense store.
    s = jnp.sum(h_all_scr[...] * w3_ref[...], axis=-1) + b3_ref[...]   # (Tc, B)
    score_ref[...] = jnp.maximum(s, 0.0).astype(score_ref.dtype)


def detector_rnn_forward(word1_seq, word2_seq, h0, params, *, time_chunk=8):
    """Run the DetectorRNN over a whole (word1, word2) sequence in one pallas_call."""
    T, B, H = word1_seq.shape
    Tc = min(time_chunk, T)
    assert T % Tc == 0, "demo wrapper requires T divisible by the time chunk"
    f32 = jnp.float32

    # One-time parameter layout (outside the time loop).
    # TODO(synk): at production hidden_size=300, pad H->384 / 3H->1152 here and cast the
    #             resident weights to bfloat16 (keep f32 accumulation + epilogue).
    W1t = params["W1"].T.astype(f32)                  # (H, H)
    W2t = params["W2"].T.astype(f32)                  # (H, H)
    b1 = params["b1"].reshape(1, H).astype(f32)
    b2 = params["b2"].reshape(1, H).astype(f32)
    Wih1t = params["W_ih"][:, :H].T.astype(f32)       # (H, 3H) acts on relu(W1 word1)
    Wih2t = params["W_ih"][:, H:].T.astype(f32)       # (H, 3H) acts on relu(W2 word2)
    bih = params["b_ih"].reshape(1, 3 * H).astype(f32)
    Whht = params["W_hh"].T.astype(f32)               # (H, 3H)
    bhh = params["b_hh"].reshape(1, 3 * H).astype(f32)
    w3 = params["W3"].reshape(1, H).astype(f32)       # native nn.Linear row
    b3 = params["b3"].reshape(1, 1).astype(f32)

    const = lambda c: (0, 0)

    scores, h_final = pl.pallas_call(
        detector_rnn_kernel,
        out_shape=(
            jax.ShapeDtypeStruct((T, B), f32),        # scores, f32 (lane-dense per chunk)
            jax.ShapeDtypeStruct((B, H), f32),        # final hidden
        ),
        grid_spec=pltpu.PrefetchScalarGridSpec(
            num_scalar_prefetch=0,
            grid=(T // Tc,),
            in_specs=[
                pl.BlockSpec((Tc, B, H), lambda c: (c, 0, 0)),  # word1 chunk
                pl.BlockSpec((Tc, B, H), lambda c: (c, 0, 0)),  # word2 chunk
                pl.BlockSpec((B, H), const),                    # h0 (read at chunk 0)
                pl.BlockSpec((H, H), const),                    # W1^T (resident)
                pl.BlockSpec((1, H), const),                    # b1
                pl.BlockSpec((H, H), const),                    # W2^T
                pl.BlockSpec((1, H), const),                    # b2
                pl.BlockSpec((H, 3 * H), const),                # W_ih[:, :H]^T
                pl.BlockSpec((H, 3 * H), const),                # W_ih[:, H:]^T
                pl.BlockSpec((1, 3 * H), const),                # b_ih
                pl.BlockSpec((H, 3 * H), const),                # W_hh^T
                pl.BlockSpec((1, 3 * H), const),                # b_hh
                pl.BlockSpec((1, H), const),                    # W3 row
                pl.BlockSpec((1, 1), const),                    # b3
            ],
            out_specs=[
                pl.BlockSpec((Tc, B), lambda c: (c, 0)),        # per-chunk scores
                pl.BlockSpec((B, H), const),                    # final hidden (resident)
            ],
            scratch_shapes=[
                pltpu.VMEM((Tc, B, 3 * H), f32),                # pre-computed input gates
                pltpu.VMEM((Tc, B, H), f32),                    # per-step hiddens for head
            ],
        ),
        compiler_params=pltpu.CompilerParams(
            # Time chunks carry the hidden state -> sequential ("arbitrary") axis.
            dimension_semantics=("arbitrary",),
        ),
    )(word1_seq.astype(f32), word2_seq.astype(f32), h0.astype(f32),
      W1t, b1, W2t, b2, Wih1t, Wih2t, bih, Whht, bhh, w3, b3)

    return scores.reshape(T, B, 1), h_final


def reference_forward(word1_seq, word2_seq, h0, params):
    """Pure-JAX reference matching torch semantics (W1/W2 relu -> cat -> GRU -> W3 relu)."""
    H = h0.shape[1]
    W1, b1 = params["W1"], params["b1"]
    W2, b2 = params["W2"], params["b2"]
    W_ih, b_ih = params["W_ih"], params["b_ih"]
    W_hh, b_hh = params["W_hh"], params["b_hh"]
    W3, b3 = params["W3"], params["b3"]

    def step(h, xs):
        w1, w2 = xs
        a1 = jnp.maximum(w1 @ W1.T + b1, 0.0)
        a2 = jnp.maximum(w2 @ W2.T + b2, 0.0)
        x = jnp.concatenate([a1, a2], axis=1)
        gi = x @ W_ih.T + b_ih
        gh = h @ W_hh.T + b_hh
        r = 1.0 / (1.0 + jnp.exp(-(gi[:, :H] + gh[:, :H])))
        z = 1.0 / (1.0 + jnp.exp(-(gi[:, H:2 * H] + gh[:, H:2 * H])))
        n = jnp.tanh(gi[:, 2 * H:] + r * gh[:, 2 * H:])
        h_new = (1.0 - z) * n + z * h
        s = jnp.maximum(h_new @ W3.T + b3, 0.0)
        return h_new, s

    h_final, scores = jax.lax.scan(step, h0, (word1_seq, word2_seq))
    return scores, h_final


if __name__ == "__main__":
    # Small shapes consistent with the module: hidden=32; the batch dim vectorizes
    # independent detector instances (module uses batch 1). T=16 with Tc=8 exercises
    # the chunked grid and the cross-chunk hidden-state carry.
    T, B, H = 16, 8, 32
    key = jax.random.PRNGKey(0)
    keys = jax.random.split(key, 12)

    def uinit(k, shape, fan):
        bound = 1.0 / (fan ** 0.5)
        return jax.random.uniform(k, shape, minval=-bound, maxval=bound, dtype=jnp.float32)

    params = {
        "W1": uinit(keys[0], (H, H), H),           "b1": uinit(keys[1], (H,), H),
        "W2": uinit(keys[2], (H, H), H),           "b2": uinit(keys[3], (H,), H),
        "W_ih": uinit(keys[4], (3 * H, 2 * H), H), "b_ih": uinit(keys[5], (3 * H,), H),
        "W_hh": uinit(keys[6], (3 * H, H), H),     "b_hh": uinit(keys[7], (3 * H,), H),
        "W3": uinit(keys[8], (1, H), H),           "b3": uinit(keys[9], (1,), H),
    }

    word1_seq = jax.random.normal(keys[10], (T, B, H), dtype=jnp.float32)
    word2_seq = jax.random.normal(keys[11], (T, B, H), dtype=jnp.float32)
    h0 = jnp.zeros((B, H), dtype=jnp.float32)      # initHidden()

    scores, h_final = detector_rnn_forward(word1_seq, word2_seq, h0, params, time_chunk=8)
    scores = jax.block_until_ready(scores)
    h_final = jax.block_until_ready(h_final)

    ref_scores, ref_h = reference_forward(word1_seq, word2_seq, h0, params)
    assert scores.shape == (T, B, 1) and h_final.shape == (B, H)
    assert jnp.allclose(scores, ref_scores, atol=1e-4, rtol=1e-4), "score mismatch vs reference"
    assert jnp.allclose(h_final, ref_h, atol=1e-4, rtol=1e-4), "hidden mismatch vs reference"

    print("KERNEL_OK")
</pallas_src>

<mosaic_0001>
module attributes {stable_mosaic.version = 11 : i64} {
  func.func @detector_rnn_kernel(%arg0: i32, %arg1: memref<8x8x32xf32, #tpu.memory_space<vmem>>, %arg2: memref<8x8x32xf32, #tpu.memory_space<vmem>>, %arg3: memref<8x32xf32, #tpu.memory_space<vmem>>, %arg4: memref<32x32xf32, #tpu.memory_space<vmem>>, %arg5: memref<1x32xf32, #tpu.memory_space<vmem>>, %arg6: memref<32x32xf32, #tpu.memory_space<vmem>>, %arg7: memref<1x32xf32, #tpu.memory_space<vmem>>, %arg8: memref<32x96xf32, #tpu.memory_space<vmem>>, %arg9: memref<32x96xf32, #tpu.memory_space<vmem>>, %arg10: memref<1x96xf32, #tpu.memory_space<vmem>>, %arg11: memref<32x96xf32, #tpu.memory_space<vmem>>, %arg12: memref<1x96xf32, #tpu.memory_space<vmem>>, %arg13: memref<1x32xf32, #tpu.memory_space<vmem>>, %arg14: memref<1x1xf32, #tpu.memory_space<vmem>>, %arg15: memref<8x8xf32, #tpu.memory_space<vmem>>, %arg16: memref<8x32xf32, #tpu.memory_space<vmem>>, %arg17: memref<8x8x96xf32, #tpu.memory_space<vmem>>, %arg18: memref<8x8x32xf32, #tpu.memory_space<vmem>>) attributes {dimension_semantics = [#tpu.dimension_semantics<arbitrary>], iteration_bounds = array<i64: 2>, scalar_prefetch = 0 : i64, scratch_operands = 2 : i64, tpu.core_type = #tpu.core_type<tc>, window_params = [{transform_indices = @transform_0, window_bounds = array<i64: 8, 8, 32>}, {transform_indices = @transform_1, window_bounds = array<i64: 8, 8, 32>}, {pipeline_mode = #tpu.pipeline_mode<synchronous>, transform_indices = @transform_2, window_bounds = array<i64: 8, 32>}, {pipeline_mode = #tpu.pipeline_mode<synchronous>, transform_indices = @transform_3, window_bounds = array<i64: 32, 32>}, {pipeline_mode = #tpu.pipeline_mode<synchronous>, transform_indices = @transform_4, window_bounds = array<i64: 1, 32>}, {pipeline_mode = #tpu.pipeline_mode<synchronous>, transform_indices = @transform_5, window_bounds = array<i64: 32, 32>}, {pipeline_mode = #tpu.pipeline_mode<synchronous>, transform_indices = @transform_6, window_bounds = array<i64: 1, 32>}, {pipeline_mode = #tpu.pipeline_mode<synchronous>, transform_indices = @transform_7, window_bounds = array<i64: 32, 96>}, {pipeline_mode = #tpu.pipeline_mode<synchronous>, transform_indices = @transform_8, window_bounds = array<i64: 32, 96>}, {pipeline_mode = #tpu.pipeline_mode<synchronous>, transform_indices = @transform_9, window_bounds = array<i64: 1, 96>}, {pipeline_mode = #tpu.pipeline_mode<synchronous>, transform_indices = @transform_10, window_bounds = array<i64: 32, 96>}, {pipeline_mode = #tpu.pipeline_mode<synchronous>, transform_indices = @transform_11, window_bounds = array<i64: 1, 96>}, {pipeline_mode = #tpu.pipeline_mode<synchronous>, transform_indices = @transform_12, window_bounds = array<i64: 1, 32>}, {pipeline_mode = #tpu.pipeline_mode<synchronous>, transform_indices = @transform_13, window_bounds = array<i64: 1, 1>}, {transform_indices = @transform_14, window_bounds = array<i64: 8, 8>}, {pipeline_mode = #tpu.pipeline_mode<synchronous>, transform_indices = @transform_15, window_bounds = array<i64: 8, 32>}]} {
    %c0_i32 = arith.constant 0 : i32
    %0 = arith.cmpi eq, %arg0, %c0_i32 : i32
    %1 = arith.extui %0 : i1 to i32
    %c0_i32_0 = arith.constant 0 : i32
    %2 = arith.cmpi ne, %1, %c0_i32_0 : i32
    scf.if %2 {
      %c0_112 = arith.constant 0 : index
      %c0_113 = arith.constant 0 : index
      %329 = vector.load %arg3[%c0_112, %c0_113] : memref<8x32xf32, #tpu.memory_space<vmem>>, vector<8x32xf32>
      %c0_114 = arith.constant 0 : index
      %c0_115 = arith.constant 0 : index
      %330 = vector.load %arg16[%c0_114, %c0_115] : memref<8x32xf32, #tpu.memory_space<vmem>>, vector<8x32xf32>
      tpu.vector_store %arg16[%c0_114, %c0_115], %329 {strides = array<i32>} : memref<8x32xf32, #tpu.memory_space<vmem>>, vector<8x32xf32>,
    } else {
    }
    %c0 = arith.constant 0 : index
    %c0_1 = arith.constant 0 : index
    %c0_2 = arith.constant 0 : index
    %3 = vector.load %arg1[%c0, %c0_1, %c0_2] : memref<8x8x32xf32, #tpu.memory_space<vmem>>, vector<8x8x32xf32>
    %4 = vector.shape_cast %3 : vector<8x8x32xf32> to vector<64x32xf32>
    %c0_3 = arith.constant 0 : index
    %c0_4 = arith.constant 0 : index
    %c0_5 = arith.constant 0 : index
    %5 = vector.load %arg2[%c0_3, %c0_4, %c0_5] : memref<8x8x32xf32, #tpu.memory_space<vmem>>, vector<8x8x32xf32>
    %6 = vector.shape_cast %5 : vector<8x8x32xf32> to vector<64x32xf32>
    %c0_6 = arith.constant 0 : index
    %c0_7 = arith.constant 0 : index
    %7 = vector.load %arg4[%c0_6, %c0_7] : memref<32x32xf32, #tpu.memory_space<vmem>>, vector<32x32xf32>
    %cst = arith.constant dense<0.000000e+00> : vector<64x32xf32>
    %8 = tpu.matmul %4, %7, %cst {dimension_numbers = #tpu.dot_dimension_numbers<[1], [0], [0], [1], [0, 0, 1, 1], [], []>} : vector<64x32xf32>, vector<32x32xf32>, vector<64x32xf32> -> vector<64x32xf32>
    %c0_8 = arith.constant 0 : index
    %c0_9 = arith.constant 0 : index
    %9 = vector.load %arg5[%c0_8, %c0_9] : memref<1x32xf32, #tpu.memory_space<vmem>>, vector<1x32xf32>
    %10 = vector.broadcast %9 : vector<1x32xf32> to vector<64x32xf32>
    %11 = arith.addf %8, %10 : vector<64x32xf32>
    %cst_10 = arith.constant 0.000000e+00 : f32
    %12 = vector.broadcast %cst_10 : f32 to vector<64x32xf32>
    %13 = arith.maximumf %11, %12 : vector<64x32xf32>
    %c0_11 = arith.constant 0 : index
    %c0_12 = arith.constant 0 : index
    %14 = vector.load %arg6[%c0_11, %c0_12] : memref<32x32xf32, #tpu.memory_space<vmem>>, vector<32x32xf32>
    %cst_13 = arith.constant dense<0.000000e+00> : vector<64x32xf32>
    %15 = tpu.matmul %6, %14, %cst_13 {dimension_numbers = #tpu.dot_dimension_numbers<[1], [0], [0], [1], [0, 0, 1, 1], [], []>} : vector<64x32xf32>, vector<32x32xf32>, vector<64x32xf32> -> vector<64x32xf32>
    %c0_14 = arith.constant 0 : index
    %c0_15 = arith.constant 0 : index
    %16 = vector.load %arg7[%c0_14, %c0_15] : memref<1x32xf32, #tpu.memory_space<vmem>>, vector<1x32xf32>
    %17 = vector.broadcast %16 : vector<1x32xf32> to vector<64x32xf32>
    %18 = arith.addf %15, %17 : vector<64x32xf32>
    %cst_16 = arith.constant 0.000000e+00 : f32
    %19 = vector.broadcast %cst_16 : f32 to vector<64x32xf32>
    %20 = arith.maximumf %18, %19 : vector<64x32xf32>
    %c0_17 = arith.constant 0 : index
    %c0_18 = arith.constant 0 : index
    %21 = vector.load %arg8[%c0_17, %c0_18] : memref<32x96xf32, #tpu.memory_space<vmem>>, vector<32x96xf32>
    %cst_19 = arith.constant dense<0.000000e+00> : vector<64x96xf32>
    %22 = tpu.matmul %13, %21, %cst_19 {dimension_numbers = #tpu.dot_dimension_numbers<[1], [0], [0], [1], [0, 0, 1, 1], [], []>} : vector<64x32xf32>, vector<32x96xf32>, vector<64x96xf32> -> vector<64x96xf32>
    %c0_20 = arith.constant 0 : index
    %c0_21 = arith.constant 0 : index
    %23 = vector.load %arg9[%c0_20, %c0_21] : memref<32x96xf32, #tpu.memory_space<vmem>>, vector<32x96xf32>
    %cst_22 = arith.constant dense<0.000000e+00> : vector<64x96xf32>
    %24 = tpu.matmul %20, %23, %cst_22 {dimension_numbers = #tpu.dot_dimension_numbers<[1], [0], [0], [1], [0, 0, 1, 1], [], []>} : vector<64x32xf32>, vector<32x96xf32>, vector<64x96xf32> -> vector<64x96xf32>
    %25 = arith.addf %22, %24 : vector<64x96xf32>
    %c0_23 = arith.constant 0 : index
    %c0_24 = arith.constant 0 : index
    %26 = vector.load %arg10[%c0_23, %c0_24] : memref<1x96xf32, #tpu.memory_space<vmem>>, vector<1x96xf32>
    %27 = vector.broadcast %26 : vector<1x96xf32> to vector<64x96xf32>
    %28 = arith.addf %25, %27 : vector<64x96xf32>
    %29 = vector.shape_cast %28 : vector<64x96xf32> to vector<8x8x96xf32>
    %c0_25 = arith.constant 0 : index
    %c0_26 = arith.constant 0 : index
    %c0_27 = arith.constant 0 : index
    %30 = vector.load %arg17[%c0_25, %c0_26, %c0_27] : memref<8x8x96xf32, #tpu.memory_space<vmem>>, vector<8x8x96xf32>
    tpu.vector_store %arg17[%c0_25, %c0_26, %c0_27], %29 {strides = array<i32>} : memref<8x8x96xf32, #tpu.memory_space<vmem>>, vector<8x8x96xf32>,
    %c0_28 = arith.constant 0 : index
    %c0_29 = arith.constant 0 : index
    %31 = vector.load %arg11[%c0_28, %c0_29] : memref<32x96xf32, #tpu.memory_space<vmem>>, vector<32x96xf32>
    %c0_30 = arith.constant 0 : index
    %c0_31 = arith.constant 0 : index
    %32 = vector.load %arg12[%c0_30, %c0_31] : memref<1x96xf32, #tpu.memory_space<vmem>>, vector<1x96xf32>
    %33 = vector.shape_cast %32 : vector<1x96xf32> to vector<1x96xf32>
    %34 = vector.broadcast %33 : vector<1x96xf32> to vector<8x96xf32>
    %c0_32 = arith.constant 0 : index
    %c0_33 = arith.constant 0 : index
    %35 = vector.load %arg16[%c0_32, %c0_33] : memref<8x32xf32, #tpu.memory_space<vmem>>, vector<8x32xf32>
    %c0_i32_34 = arith.constant 0 : i32
    %36 = arith.index_cast %c0_i32_34 : i32 to index
    %c0_35 = arith.constant 0 : index
    %c0_36 = arith.constant 0 : index
    %37 = vector.load %arg17[%36, %c0_35, %c0_36] : memref<8x8x96xf32, #tpu.memory_space<vmem>>, vector<1x8x96xf32>
    %38 = vector.shape_cast %37 : vector<1x8x96xf32> to vector<8x96xf32>
    %cst_37 = arith.constant dense<0.000000e+00> : vector<8x96xf32>
    %39 = tpu.matmul %35, %31, %cst_37 {dimension_numbers = #tpu.dot_dimension_numbers<[1], [0], [0], [1], [0, 0, 1, 1], [], []>} : vector<8x32xf32>, vector<32x96xf32>, vector<8x96xf32> -> vector<8x96xf32>
    %40 = arith.addf %39, %34 : vector<8x96xf32>
    %41 = vector.extract_strided_slice %38 {offsets = [0, 0], sizes = [8, 32], strides = [1, 1]} : vector<8x96xf32> to vector<8x32xf32>
    %42 = vector.extract_strided_slice %40 {offsets = [0, 0], sizes = [8, 32], strides = [1, 1]} : vector<8x96xf32> to vector<8x32xf32>
    %43 = arith.addf %41, %42 : vector<8x32xf32>
    %44 = arith.negf %43 : vector<8x32xf32>
    %45 = math.exp %44 : vector<8x32xf32>
    %cst_38 = arith.constant 1.000000e+00 : f32
    %46 = vector.broadcast %cst_38 : f32 to vector<8x32xf32>
    %47 = arith.addf %46, %45 : vector<8x32xf32>
    %48 = arith.divf %46, %47 : vector<8x32xf32>
    %49 = vector.extract_strided_slice %38 {offsets = [0, 32], sizes = [8, 32], strides = [1, 1]} : vector<8x96xf32> to vector<8x32xf32>
    %50 = vector.extract_strided_slice %40 {offsets = [0, 32], sizes = [8, 32], strides = [1, 1]} : vector<8x96xf32> to vector<8x32xf32>
    %51 = arith.addf %49, %50 : vector<8x32xf32>
    %52 = arith.negf %51 : vector<8x32xf32>
    %53 = math.exp %52 : vector<8x32xf32>
    %cst_39 = arith.constant 1.000000e+00 : f32
    %54 = vector.broadcast %cst_39 : f32 to vector<8x32xf32>
    %55 = arith.addf %54, %53 : vector<8x32xf32>
    %56 = arith.divf %54, %55 : vector<8x32xf32>
    %57 = vector.extract_strided_slice %38 {offsets = [0, 64], sizes = [8, 32], strides = [1, 1]} : vector<8x96xf32> to vector<8x32xf32>
    %58 = vector.extract_strided_slice %40 {offsets = [0, 64], sizes = [8, 32], strides = [1, 1]} : vector<8x96xf32> to vector<8x32xf32>
    %59 = arith.mulf %48, %58 : vector<8x32xf32>
    %60 = arith.addf %57, %59 : vector<8x32xf32>
    %61 = math.tanh %60 : vector<8x32xf32>
    %cst_40 = arith.constant 1.000000e+00 : f32
    %62 = vector.broadcast %cst_40 : f32 to vector<8x32xf32>
    %63 = arith.subf %62, %56 : vector<8x32xf32>
    %64 = arith.mulf %63, %61 : vector<8x32xf32>
    %65 = arith.mulf %56, %35 : vector<8x32xf32>
    %66 = arith.addf %64, %65 : vector<8x32xf32>
    %67 = arith.index_cast %c0_i32_34 : i32 to index
    %c0_41 = arith.constant 0 : index
    %c0_42 = arith.constant 0 : index
    %68 = vector.load %arg18[%67, %c0_41, %c0_42] : memref<8x8x32xf32, #tpu.memory_space<vmem>>, vector<1x8x32xf32>
    %69 = vector.shape_cast %68 : vector<1x8x32xf32> to vector<8x32xf32>
    %70 = vector.shape_cast %66 : vector<8x32xf32> to vector<1x8x32xf32>
    tpu.vector_store %arg18[%67, %c0_41, %c0_42], %70 {strides = array<i32>} : memref<8x8x32xf32, #tpu.memory_space<vmem>>, vector<1x8x32xf32>,
    %c1_i32 = arith.constant 1 : i32
    %71 = arith.index_cast %c1_i32 : i32 to index
    %c0_43 = arith.constant 0 : index
    %c0_44 = arith.constant 0 : index
    %72 = vector.load %arg17[%71, %c0_43, %c0_44] : memref<8x8x96xf32, #tpu.memory_space<vmem>>, vector<1x8x96xf32>
    %73 = vector.shape_cast %72 : vector<1x8x96xf32> to vector<8x96xf32>
    %cst_45 = arith.constant dense<0.000000e+00> : vector<8x96xf32>
    %74 = tpu.matmul %66, %31, %cst_45 {dimension_numbers = #tpu.dot_dimension_numbers<[1], [0], [0], [1], [0, 0, 1, 1], [], []>} : vector<8x32xf32>, vector<32x96xf32>, vector<8x96xf32> -> vector<8x96xf32>
    %75 = arith.addf %74, %34 : vector<8x96xf32>
    %76 = vector.extract_strided_slice %73 {offsets = [0, 0], sizes = [8, 32], strides = [1, 1]} : vector<8x96xf32> to vector<8x32xf32>
    %77 = vector.extract_strided_slice %75 {offsets = [0, 0], sizes = [8, 32], strides = [1, 1]} : vector<8x96xf32> to vector<8x32xf32>
    %78 = arith.addf %76, %77 : vector<8x32xf32>
    %79 = arith.negf %78 : vector<8x32xf32>
    %80 = math.exp %79 : vector<8x32xf32>
    %cst_46 = arith.constant 1.000000e+00 : f32
    %81 = vector.broadcast %cst_46 : f32 to vector<8x32xf32>
    %82 = arith.addf %81, %80 : vector<8x32xf32>
    %83 = arith.divf %81, %82 : vector<8x32xf32>
    %84 = vector.extract_strided_slice %73 {offsets = [0, 32], sizes = [8, 32], strides = [1, 1]} : vector<8x96xf32> to vector<8x32xf32>
    %85 = vector.extract_strided_slice %75 {offsets = [0, 32], sizes = [8, 32], strides = [1, 1]} : vector<8x96xf32> to vector<8x32xf32>
    %86 = arith.addf %84, %85 : vector<8x32xf32>
    %87 = arith.negf %86 : vector<8x32xf32>
    %88 = math.exp %87 : vector<8x32xf32>
    %cst_47 = arith.constant 1.000000e+00 : f32
    %89 = vector.broadcast %cst_47 : f32 to vector<8x32xf32>
    %90 = arith.addf %89, %88 : vector<8x32xf32>
    %91 = arith.divf %89, %90 : vector<8x32xf32>
    %92 = vector.extract_strided_slice %73 {offsets = [0, 64], sizes = [8, 32], strides = [1, 1]} : vector<8x96xf32> to vector<8x32xf32>
    %93 = vector.extract_strided_slice %75 {offsets = [0, 64], sizes = [8, 32], strides = [1, 1]} : vector<8x96xf32> to vector<8x32xf32>
    %94 = arith.mulf %83, %93 : vector<8x32xf32>
    %95 = arith.addf %92, %94 : vector<8x32xf32>
    %96 = math.tanh %95 : vector<8x32xf32>
    %cst_48 = arith.constant 1.000000e+00 : f32
    %97 = vector.broadcast %cst_48 : f32 to vector<8x32xf32>
    %98 = arith.subf %97, %91 : vector<8x32xf32>
    %99 = arith.mulf %98, %96 : vector<8x32xf32>
    %100 = arith.mulf %91, %66 : vector<8x32xf32>
    %101 = arith.addf %99, %100 : vector<8x32xf32>
    %102 = arith.index_cast %c1_i32 : i32 to index
    %c0_49 = arith.constant 0 : index
    %c0_50 = arith.constant 0 : index
    %103 = vector.load %arg18[%102, %c0_49, %c0_50] : memref<8x8x32xf32, #tpu.memory_space<vmem>>, vector<1x8x32xf32>
    %104 = vector.shape_cast %103 : vector<1x8x32xf32> to vector<8x32xf32>
    %105 = vector.shape_cast %101 : vector<8x32xf32> to vector<1x8x32xf32>
    tpu.vector_store %arg18[%102, %c0_49, %c0_50], %105 {strides = array<i32>} : memref<8x8x32xf32, #tpu.memory_space<vmem>>, vector<1x8x32xf32>,
    %c2_i32 = arith.constant 2 : i32
    %106 = arith.index_cast %c2_i32 : i32 to index
    %c0_51 = arith.constant 0 : index
    %c0_52 = arith.constant 0 : index
    %107 = vector.load %arg17[%106, %c0_51, %c0_52] : memref<8x8x96xf32, #tpu.memory_space<vmem>>, vector<1x8x96xf32>
    %108 = vector.shape_cast %107 : vector<1x8x96xf32> to vector<8x96xf32>
    %cst_53 = arith.constant dense<0.000000e+00> : vector<8x96xf32>
    %109 = tpu.matmul %101, %31, %cst_53 {dimension_numbers = #tpu.dot_dimension_numbers<[1], [0], [0], [1], [0, 0, 1, 1], [], []>} : vector<8x32xf32>, vector<32x96xf32>, vector<8x96xf32> -> vector<8x96xf32>
    %110 = arith.addf %109, %34 : vector<8x96xf32>
    %111 = vector.extract_strided_slice %108 {offsets = [0, 0], sizes = [8, 32], strides = [1, 1]} : vector<8x96xf32> to vector<8x32xf32>
    %112 = vector.extract_strided_slice %110 {offsets = [0, 0], sizes = [8, 32], strides = [1, 1]} : vector<8x96xf32> to vector<8x32xf32>
    %113 = arith.addf %111, %112 : vector<8x32xf32>
    %114 = arith.negf %113 : vector<8x32xf32>
    %115 = math.exp %114 : vector<8x32xf32>
    %cst_54 = arith.constant 1.000000e+00 : f32
    %116 = vector.broadcast %cst_54 : f32 to vector<8x32xf32>
    %117 = arith.addf %116, %115 : vector<8x32xf32>
    %118 = arith.divf %116, %117 : vector<8x32xf32>
    %119 = vector.extract_strided_slice %108 {offsets = [0, 32], sizes = [8, 32], strides = [1, 1]} : vector<8x96xf32> to vector<8x32xf32>
    %120 = vector.extract_strided_slice %110 {offsets = [0, 32], sizes = [8, 32], strides = [1, 1]} : vector<8x96xf32> to vector<8x32xf32>
    %121 = arith.addf %119, %120 : vector<8x32xf32>
    %122 = arith.negf %121 : vector<8x32xf32>
    %123 = math.exp %122 : vector<8x32xf32>
    %cst_55 = arith.constant 1.000000e+00 : f32
    %124 = vector.broadcast %cst_55 : f32 to vector<8x32xf32>
    %125 = arith.addf %124, %123 : vector<8x32xf32>
    %126 = arith.divf %124, %125 : vector<8x32xf32>
    %127 = vector.extract_strided_slice %108 {offsets = [0, 64], sizes = [8, 32], strides = [1, 1]} : vector<8x96xf32> to vector<8x32xf32>
    %128 = vector.extract_strided_slice %110 {offsets = [0, 64], sizes = [8, 32], strides = [1, 1]} : vector<8x96xf32> to vector<8x32xf32>
    %129 = arith.mulf %118, %128 : vector<8x32xf32>
    %130 = arith.addf %127, %129 : vector<8x32xf32>
    %131 = math.tanh %130 : vector<8x32xf32>
    %cst_56 = arith.constant 1.000000e+00 : f32
    %132 = vector.broadcast %cst_56 : f32 to vector<8x32xf32>
    %133 = arith.subf %132, %126 : vector<8x32xf32>
    %134 = arith.mulf %133, %131 : vector<8x32xf32>
    %135 = arith.mulf %126, %101 : vector<8x32xf32>
    %136 = arith.addf %134, %135 : vector<8x32xf32>
    %137 = arith.index_cast %c2_i32 : i32 to index
    %c0_57 = arith.constant 0 : index
    %c0_58 = arith.constant 0 : index
    %138 = vector.load %arg18[%137, %c0_57, %c0_58] : memref<8x8x32xf32, #tpu.memory_space<vmem>>, vector<1x8x32xf32>
    %139 = vector.shape_cast %138 : vector<1x8x32xf32> to vector<8x32xf32>
    %140 = vector.shape_cast %136 : vector<8x32xf32> to vector<1x8x32xf32>
    tpu.vector_store %arg18[%137, %c0_57, %c0_58], %140 {strides = array<i32>} : memref<8x8x32xf32, #tpu.memory_space<vmem>>, vector<1x8x32xf32>,
    %c3_i32 = arith.constant 3 : i32
    %141 = arith.index_cast %c3_i32 : i32 to index
    %c0_59 = arith.constant 0 : index
    %c0_60 = arith.constant 0 : index
    %142 = vector.load %arg17[%141, %c0_59, %c0_60] : memref<8x8x96xf32, #tpu.memory_space<vmem>>, vector<1x8x96xf32>
    %143 = vector.shape_cast %142 : vector<1x8x96xf32> to vector<8x96xf32>
    %cst_61 = arith.constant dense<0.000000e+00> : vector<8x96xf32>
    %144 = tpu.matmul %136, %31, %cst_61 {dimension_numbers = #tpu.dot_dimension_numbers<[1], [0], [0], [1], [0, 0, 1, 1], [], []>} : vector<8x32xf32>, vector<32x96xf32>, vector<8x96xf32> -> vector<8x96xf32>
    %145 = arith.addf %144, %34 : vector<8x96xf32>
    %146 = vector.extract_strided_slice %143 {offsets = [0, 0], sizes = [8, 32], strides = [1, 1]} : vector<8x96xf32> to vector<8x32xf32>
    %147 = vector.extract_strided_slice %145 {offsets = [0, 0], sizes = [8, 32], strides = [1, 1]} : vector<8x96xf32> to vector<8x32xf32>
    %148 = arith.addf %146, %147 : vector<8x32xf32>
    %149 = arith.negf %148 : vector<8x32xf32>
    %150 = math.exp %149 : vector<8x32xf32>
    %cst_62 = arith.constant 1.000000e+00 : f32
    %151 = vector.broadcast %cst_62 : f32 to vector<8x32xf32>
    %152 = arith.addf %151, %150 : vector<8x32xf32>
    %153 = arith.divf %151, %152 : vector<8x32xf32>
    %154 = vector.extract_strided_slice %143 {offsets = [0, 32], sizes = [8, 32], strides = [1, 1]} : vector<8x96xf32> to vector<8x32xf32>
    %155 = vector.extract_strided_slice %145 {offsets = [0, 32], sizes = [8, 32], strides = [1, 1]} : vector<8x96xf32> to vector<8x32xf32>
    %156 = arith.addf %154, %155 : vector<8x32xf32>
    %157 = arith.negf %156 : vector<8x32xf32>
    %158 = math.exp %157 : vector<8x32xf32>
    %cst_63 = arith.constant 1.000000e+00 : f32
    %159 = vector.broadcast %cst_63 : f32 to vector<8x32xf32>
    %160 = arith.addf %159, %158 : vector<8x32xf32>
    %161 = arith.divf %159, %160 : vector<8x32xf32>
    %162 = vector.extract_strided_slice %143 {offsets = [0, 64], sizes = [8, 32], strides = [1, 1]} : vector<8x96xf32> to vector<8x32xf32>
    %163 = vector.extract_strided_slice %145 {offsets = [0, 64], sizes = [8, 32], strides = [1, 1]} : vector<8x96xf32> to vector<8x32xf32>
    %164 = arith.mulf %153, %163 : vector<8x32xf32>
    %165 = arith.addf %162, %164 : vector<8x32xf32>
    %166 = math.tanh %165 : vector<8x32xf32>
    %cst_64 = arith.constant 1.000000e+00 : f32
    %167 = vector.broadcast %cst_64 : f32 to vector<8x32xf32>
    %168 = arith.subf %167, %161 : vector<8x32xf32>
    %169 = arith.mulf %168, %166 : vector<8x32xf32>
    %170 = arith.mulf %161, %136 : vector<8x32xf32>
    %171 = arith.addf %169, %170 : vector<8x32xf32>
    %172 = arith.index_cast %c3_i32 : i32 to index
    %c0_65 = arith.constant 0 : index
    %c0_66 = arith.constant 0 : index
    %173 = vector.load %arg18[%172, %c0_65, %c0_66] : memref<8x8x32xf32, #tpu.memory_space<vmem>>, vector<1x8x32xf32>
    %174 = vector.shape_cast %173 : vector<1x8x32xf32> to vector<8x32xf32>
    %175 = vector.shape_cast %171 : vector<8x32xf32> to vector<1x8x32xf32>
    tpu.vector_store %arg18[%172, %c0_65, %c0_66], %175 {strides = array<i32>} : memref<8x8x32xf32, #tpu.memory_space<vmem>>, vector<1x8x32xf32>,
    %c4_i32 = arith.constant 4 : i32
    %176 = arith.index_cast %c4_i32 : i32 to index
    %c0_67 = arith.constant 0 : index
    %c0_68 = arith.constant 0 : index
    %177 = vector.load %arg17[%176, %c0_67, %c0_68] : memref<8x8x96xf32, #tpu.memory_space<vmem>>, vector<1x8x96xf32>
    %178 = vector.shape_cast %177 : vector<1x8x96xf32> to vector<8x96xf32>
    %cst_69 = arith.constant dense<0.000000e+00> : vector<8x96xf32>
    %179 = tpu.matmul %171, %31, %cst_69 {dimension_numbers = #tpu.dot_dimension_numbers<[1], [0], [0], [1], [0, 0, 1, 1], [], []>} : vector<8x32xf32>, vector<32x96xf32>, vector<8x96xf32> -> vector<8x96xf32>
    %180 = arith.addf %179, %34 : vector<8x96xf32>
    %181 = vector.extract_strided_slice %178 {offsets = [0, 0], sizes = [8, 32], strides = [1, 1]} : vector<8x96xf32> to vector<8x32xf32>
    %182 = vector.extract_strided_slice %180 {offsets = [0, 0], sizes = [8, 32], strides = [1, 1]} : vector<8x96xf32> to vector<8x32xf32>
    %183 = arith.addf %181, %182 : vector<8x32xf32>
    %184 = arith.negf %183 : vector<8x32xf32>
    %185 = math.exp %184 : vector<8x32xf32>
    %cst_70 = arith.constant 1.000000e+00 : f32
    %186 = vector.broadcast %cst_70 : f32 to vector<8x32xf32>
    %187 = arith.addf %186, %185 : vector<8x32xf32>
    %188 = arith.divf %186, %187 : vector<8x32xf32>
    %189 = vector.extract_strided_slice %178 {offsets = [0, 32], sizes = [8, 32], strides = [1, 1]} : vector<8x96xf32> to vector<8x32xf32>
    %190 = vector.extract_strided_slice %180 {offsets = [0, 32], sizes = [8, 32], strides = [1, 1]} : vector<8x96xf32> to vector<8x32xf32>
    %191 = arith.addf %189, %190 : vector<8x32xf32>
    %192 = arith.negf %191 : vector<8x32xf32>
    %193 = math.exp %192 : vector<8x32xf32>
    %cst_71 = arith.constant 1.000000e+00 : f32
    %194 = vector.broadcast %cst_71 : f32 to vector<8x32xf32>
    %195 = arith.addf %194, %193 : vector<8x32xf32>
    %196 = arith.divf %194, %195 : vector<8x32xf32>
    %197 = vector.extract_strided_slice %178 {offsets = [0, 64], sizes = [8, 32], strides = [1, 1]} : vector<8x96xf32> to vector<8x32xf32>
    %198 = vector.extract_strided_slice %180 {offsets = [0, 64], sizes = [8, 32], strides = [1, 1]} : vector<8x96xf32> to vector<8x32xf32>
    %199 = arith.mulf %188, %198 : vector<8x32xf32>
    %200 = arith.addf %197, %199 : vector<8x32xf32>
    %201 = math.tanh %200 : vector<8x32xf32>
    %cst_72 = arith.constant 1.000000e+00 : f32
    %202 = vector.broadcast %cst_72 : f32 to vector<8x32xf32>
    %203 = arith.subf %202, %196 : vector<8x32xf32>
    %204 = arith.mulf %203, %201 : vector<8x32xf32>
    %205 = arith.mulf %196, %171 : vector<8x32xf32>
    %206 = arith.addf %204, %205 : vector<8x32xf32>
    %207 = arith.index_cast %c4_i32 : i32 to index
    %c0_73 = arith.constant 0 : index
    %c0_74 = arith.constant 0 : index
    %208 = vector.load %arg18[%207, %c0_73, %c0_74] : memref<8x8x32xf32, #tpu.memory_space<vmem>>, vector<1x8x32xf32>
    %209 = vector.shape_cast %208 : vector<1x8x32xf32> to vector<8x32xf32>
    %210 = vector.shape_cast %206 : vector<8x32xf32> to vector<1x8x32xf32>
    tpu.vector_store %arg18[%207, %c0_73, %c0_74], %210 {strides = array<i32>} : memref<8x8x32xf32, #tpu.memory_space<vmem>>, vector<1x8x32xf32>,
    %c5_i32 = arith.constant 5 : i32
    %211 = arith.index_cast %c5_i32 : i32 to index
    %c0_75 = arith.constant 0 : index
    %c0_76 = arith.constant 0 : index
    %212 = vector.load %arg17[%211, %c0_75, %c0_76] : memref<8x8x96xf32, #tpu.memory_space<vmem>>, vector<1x8x96xf32>
    %213 = vector.shape_cast %212 : vector<1x8x96xf32> to vector<8x96xf32>
    %cst_77 = arith.constant dense<0.000000e+00> : vector<8x96xf32>
    %214 = tpu.matmul %206, %31, %cst_77 {dimension_numbers = #tpu.dot_dimension_numbers<[1], [0], [0], [1], [0, 0, 1, 1], [], []>} : vector<8x32xf32>, vector<32x96xf32>, vector<8x96xf32> -> vector<8x96xf32>
    %215 = arith.addf %214, %34 : vector<8x96xf32>
    %216 = vector.extract_strided_slice %213 {offsets = [0, 0], sizes = [8, 32], strides = [1, 1]} : vector<8x96xf32> to vector<8x32xf32>
    %217 = vector.extract_strided_slice %215 {offsets = [0, 0], sizes = [8, 32], strides = [1, 1]} : vector<8x96xf32> to vector<8x32xf32>
    %218 = arith.addf %216, %217 : vector<8x32xf32>
    %219 = arith.negf %218 : vector<8x32xf32>
    %220 = math.exp %219 : vector<8x32xf32>
    %cst_78 = arith.constant 1.000000e+00 : f32
    %221 = vector.broadcast %cst_78 : f32 to vector<8x32xf32>
    %222 = arith.addf %221, %220 : vector<8x32xf32>
    %223 = arith.divf %221, %222 : vector<8x32xf32>
    %224 = vector.extract_strided_slice %213 {offsets = [0, 32], sizes = [8, 32], strides = [1, 1]} : vector<8x96xf32> to vector<8x32xf32>
    %225 = vector.extract_strided_slice %215 {offsets = [0, 32], sizes = [8, 32], strides = [1, 1]} : vector<8x96xf32> to vector<8x32xf32>
    %226 = arith.addf %224, %225 : vector<8x32xf32>
    %227 = arith.negf %226 : vector<8x32xf32>
    %228 = math.exp %227 : vector<8x32xf32>
    %cst_79 = arith.constant 1.000000e+00 : f32
    %229 = vector.broadcast %cst_79 : f32 to vector<8x32xf32>
    %230 = arith.addf %229, %228 : vector<8x32xf32>
    %231 = arith.divf %229, %230 : vector<8x32xf32>
    %232 = vector.extract_strided_slice %213 {offsets = [0, 64], sizes = [8, 32], strides = [1, 1]} : vector<8x96xf32> to vector<8x32xf32>
    %233 = vector.extract_strided_slice %215 {offsets = [0, 64], sizes = [8, 32], strides = [1, 1]} : vector<8x96xf32> to vector<8x32xf32>
    %234 = arith.mulf %223, %233 : vector<8x32xf32>
    %235 = arith.addf %232, %234 : vector<8x32xf32>
    %236 = math.tanh %235 : vector<8x32xf32>
    %cst_80 = arith.constant 1.000000e+00 : f32
    %237 = vector.broadcast %cst_80 : f32 to vector<8x32xf32>
    %238 = arith.subf %237, %231 : vector<8x32xf32>
    %239 = arith.mulf %238, %236 : vector<8x32xf32>
    %240 = arith.mulf %231, %206 : vector<8x32xf32>
    %241 = arith.addf %239, %240 : vector<8x32xf32>
    %242 = arith.index_cast %c5_i32 : i32 to index
    %c0_81 = arith.constant 0 : index
    %c0_82 = arith.constant 0 : index
    %243 = vector.load %arg18[%242, %c0_81, %c0_82] : memref<8x8x32xf32, #tpu.memory_space<vmem>>, vector<1x8x32xf32>
    %244 = vector.shape_cast %243 : vector<1x8x32xf32> to vector<8x32xf32>
    %245 = vector.shape_cast %241 : vector<8x32xf32> to vector<1x8x32xf32>
    tpu.vector_store %arg18[%242, %c0_81, %c0_82], %245 {strides = array<i32>} : memref<8x8x32xf32, #tpu.memory_space<vmem>>, vector<1x8x32xf32>,
    %c6_i32 = arith.constant 6 : i32
    %246 = arith.index_cast %c6_i32 : i32 to index
    %c0_83 = arith.constant 0 : index
    %c0_84 = arith.constant 0 : index
    %247 = vector.load %arg17[%246, %c0_83, %c0_84] : memref<8x8x96xf32, #tpu.memory_space<vmem>>, vector<1x8x96xf32>
    %248 = vector.shape_cast %247 : vector<1x8x96xf32> to vector<8x96xf32>
    %cst_85 = arith.constant dense<0.000000e+00> : vector<8x96xf32>
    %249 = tpu.matmul %241, %31, %cst_85 {dimension_numbers = #tpu.dot_dimension_numbers<[1], [0], [0], [1], [0, 0, 1, 1], [], []>} : vector<8x32xf32>, vector<32x96xf32>, vector<8x96xf32> -> vector<8x96xf32>
    %250 = arith.addf %249, %34 : vector<8x96xf32>
    %251 = vector.extract_strided_slice %248 {offsets = [0, 0], sizes = [8, 32], strides = [1, 1]} : vector<8x96xf32> to vector<8x32xf32>
    %252 = vector.extract_strided_slice %250 {offsets = [0, 0], sizes = [8, 32], strides = [1, 1]} : vector<8x96xf32> to vector<8x32xf32>
    %253 = arith.addf %251, %252 : vector<8x32xf32>
    %254 = arith.negf %253 : vector<8x32xf32>
    %255 = math.exp %254 : vector<8x32xf32>
    %cst_86 = arith.constant 1.000000e+00 : f32
    %256 = vector.broadcast %cst_86 : f32 to vector<8x32xf32>
    %257 = arith.addf %256, %255 : vector<8x32xf32>
    %258 = arith.divf %256, %257 : vector<8x32xf32>
    %259 = vector.extract_strided_slice %248 {offsets = [0, 32], sizes = [8, 32], strides = [1, 1]} : vector<8x96xf32> to vector<8x32xf32>
    %260 = vector.extract_strided_slice %250 {offsets = [0, 32], sizes = [8, 32], strides = [1, 1]} : vector<8x96xf32> to vector<8x32xf32>
    %261 = arith.addf %259, %260 : vector<8x32xf32>
    %262 = arith.negf %261 : vector<8x32xf32>
    %263 = math.exp %262 : vector<8x32xf32>
    %cst_87 = arith.constant 1.000000e+00 : f32
    %264 = vector.broadcast %cst_87 : f32 to vector<8x32xf32>
    %265 = arith.addf %264, %263 : vector<8x32xf32>
    %266 = arith.divf %264, %265 : vector<8x32xf32>
    %267 = vector.extract_strided_slice %248 {offsets = [0, 64], sizes = [8, 32], strides = [1, 1]} : vector<8x96xf32> to vector<8x32xf32>
    %268 = vector.extract_strided_slice %250 {offsets = [0, 64], sizes = [8, 32], strides = [1, 1]} : vector<8x96xf32> to vector<8x32xf32>
    %269 = arith.mulf %258, %268 : vector<8x32xf32>
    %270 = arith.addf %267, %269 : vector<8x32xf32>
    %271 = math.tanh %270 : vector<8x32xf32>
    %cst_88 = arith.constant 1.000000e+00 : f32
    %272 = vector.broadcast %cst_88 : f32 to vector<8x32xf32>
    %273 = arith.subf %272, %266 : vector<8x32xf32>
    %274 = arith.mulf %273, %271 : vector<8x32xf32>
    %275 = arith.mulf %266, %241 : vector<8x32xf32>
    %276 = arith.addf %274, %275 : vector<8x32xf32>
    %277 = arith.index_cast %c6_i32 : i32 to index
    %c0_89 = arith.constant 0 : index
    %c0_90 = arith.constant 0 : index
    %278 = vector.load %arg18[%277, %c0_89, %c0_90] : memref<8x8x32xf32, #tpu.memory_space<vmem>>, vector<1x8x32xf32>
    %279 = vector.shape_cast %278 : vector<1x8x32xf32> to vector<8x32xf32>
    %280 = vector.shape_cast %276 : vector<8x32xf32> to vector<1x8x32xf32>
    tpu.vector_store %arg18[%277, %c0_89, %c0_90], %280 {strides = array<i32>} : memref<8x8x32xf32, #tpu.memory_space<vmem>>, vector<1x8x32xf32>,
    %c7_i32 = arith.constant 7 : i32
    %281 = arith.index_cast %c7_i32 : i32 to index
    %c0_91 = arith.constant 0 : index
    %c0_92 = arith.constant 0 : index
    %282 = vector.load %arg17[%281, %c0_91, %c0_92] : memref<8x8x96xf32, #tpu.memory_space<vmem>>, vector<1x8x96xf32>
    %283 = vector.shape_cast %282 : vector<1x8x96xf32> to vector<8x96xf32>
    %cst_93 = arith.constant dense<0.000000e+00> : vector<8x96xf32>
    %284 = tpu.matmul %276, %31, %cst_93 {dimension_numbers = #tpu.dot_dimension_numbers<[1], [0], [0], [1], [0, 0, 1, 1], [], []>} : vector<8x32xf32>, vector<32x96xf32>, vector<8x96xf32> -> vector<8x96xf32>
    %285 = arith.addf %284, %34 : vector<8x96xf32>
    %286 = vector.extract_strided_slice %283 {offsets = [0, 0], sizes = [8, 32], strides = [1, 1]} : vector<8x96xf32> to vector<8x32xf32>
    %287 = vector.extract_strided_slice %285 {offsets = [0, 0], sizes = [8, 32], strides = [1, 1]} : vector<8x96xf32> to vector<8x32xf32>
    %288 = arith.addf %286, %287 : vector<8x32xf32>
    %289 = arith.negf %288 : vector<8x32xf32>
    %290 = math.exp %289 : vector<8x32xf32>
    %cst_94 = arith.constant 1.000000e+00 : f32
    %291 = vector.broadcast %cst_94 : f32 to vector<8x32xf32>
    %292 = arith.addf %291, %290 : vector<8x32xf32>
    %293 = arith.divf %291, %292 : vector<8x32xf32>
    %294 = vector.extract_strided_slice %283 {offsets = [0, 32], sizes = [8, 32], strides = [1, 1]} : vector<8x96xf32> to vector<8x32xf32>
    %295 = vector.extract_strided_slice %285 {offsets = [0, 32], sizes = [8, 32], strides = [1, 1]} : vector<8x96xf32> to vector<8x32xf32>
    %296 = arith.addf %294, %295 : vector<8x32xf32>
    %297 = arith.negf %296 : vector<8x32xf32>
    %298 = math.exp %297 : vector<8x32xf32>
    %cst_95 = arith.constant 1.000000e+00 : f32
    %299 = vector.broadcast %cst_95 : f32 to vector<8x32xf32>
    %300 = arith.addf %299, %298 : vector<8x32xf32>
    %301 = arith.divf %299, %300 : vector<8x32xf32>
    %302 = vector.extract_strided_slice %283 {offsets = [0, 64], sizes = [8, 32], strides = [1, 1]} : vector<8x96xf32> to vector<8x32xf32>
    %303 = vector.extract_strided_slice %285 {offsets = [0, 64], sizes = [8, 32], strides = [1, 1]} : vector<8x96xf32> to vector<8x32xf32>
    %304 = arith.mulf %293, %303 : vector<8x32xf32>
    %305 = arith.addf %302, %304 : vector<8x32xf32>
    %306 = math.tanh %305 : vector<8x32xf32>
    %cst_96 = arith.constant 1.000000e+00 : f32
    %307 = vector.broadcast %cst_96 : f32 to vector<8x32xf32>
    %308 = arith.subf %307, %301 : vector<8x32xf32>
    %309 = arith.mulf %308, %306 : vector<8x32xf32>
    %310 = arith.mulf %301, %276 : vector<8x32xf32>
    %311 = arith.addf %309, %310 : vector<8x32xf32>
    %312 = arith.index_cast %c7_i32 : i32 to index
    %c0_97 = arith.constant 0 : index
    %c0_98 = arith.constant 0 : index
    %313 = vector.load %arg18[%312, %c0_97, %c0_98] : memref<8x8x32xf32, #tpu.memory_space<vmem>>, vector<1x8x32xf32>
    %314 = vector.shape_cast %313 : vector<1x8x32xf32> to vector<8x32xf32>
    %315 = vector.shape_cast %311 : vector<8x32xf32> to vector<1x8x32xf32>
    tpu.vector_store %arg18[%312, %c0_97, %c0_98], %315 {strides = array<i32>} : memref<8x8x32xf32, #tpu.memory_space<vmem>>, vector<1x8x32xf32>,
    %c8_i32 = arith.constant 8 : i32
    %c0_99 = arith.constant 0 : index
    %c0_100 = arith.constant 0 : index
    %316 = vector.load %arg16[%c0_99, %c0_100] : memref<8x32xf32, #tpu.memory_space<vmem>>, vector<8x32xf32>
    tpu.vector_store %arg16[%c0_99, %c0_100], %311 {strides = array<i32>} : memref<8x32xf32, #tpu.memory_space<vmem>>, vector<8x32xf32>,
    %c0_101 = arith.constant 0 : index
    %c0_102 = arith.constant 0 : index
    %c0_103 = arith.constant 0 : index
    %317 = vector.load %arg18[%c0_101, %c0_102, %c0_103] : memref<8x8x32xf32, #tpu.memory_space<vmem>>, vector<8x8x32xf32>
    %c0_104 = arith.constant 0 : index
    %c0_105 = arith.constant 0 : index
    %318 = vector.load %arg13[%c0_104, %c0_105] : memref<1x32xf32, #tpu.memory_space<vmem>>, vector<1x32xf32>
    %319 = vector.shape_cast %318 : vector<1x32xf32> to vector<1x1x32xf32>
    %320 = vector.broadcast %319 : vector<1x1x32xf32> to vector<8x8x32xf32>
    %321 = arith.mulf %317, %320 : vector<8x8x32xf32>
    %cst_106 = arith.constant dense<0.000000e+00> : vector<8x8xf32>
    %322 = vector.multi_reduction <add>, %321, %cst_106 [2] : vector<8x8x32xf32> to vector<8x8xf32>
    %c0_107 = arith.constant 0 : index
    %c0_108 = arith.constant 0 : index
    %323 = vector.load %arg14[%c0_107, %c0_108] : memref<1x1xf32, #tpu.memory_space<vmem>>, vector<1x1xf32>
    %324 = vector.broadcast %323 : vector<1x1xf32> to vector<8x8xf32>
    %325 = arith.addf %322, %324 : vector<8x8xf32>
    %cst_109 = arith.constant 0.000000e+00 : f32
    %326 = vector.broadcast %cst_109 : f32 to vector<8x8xf32>
    %327 = arith.maximumf %325, %326 : vector<8x8xf32>
    %c0_110 = arith.constant 0 : index
    %c0_111 = arith.constant 0 : index
    %328 = vector.load %arg15[%c0_110, %c0_111] : memref<8x8xf32, #tpu.memory_space<vmem>>, vector<8x8xf32>
    tpu.vector_store %arg15[%c0_110, %c0_111], %327 {strides = array<i32>} : memref<8x8xf32, #tpu.memory_space<vmem>>, vector<8x8xf32>,
    return
  }
  func.func @transform_0(%arg0: i32) -> (i32, i32, i32) {
    %c0_i32 = arith.constant 0 : i32
    %c0_i32_0 = arith.constant 0 : i32
    %c0_i32_1 = arith.constant 0 : i32
    return %arg0, %c0_i32, %c0_i32_0 : i32, i32, i32
  }
  func.func @transform_1(%arg0: i32) -> (i32, i32, i32) {
    %c0_i32 = arith.constant 0 : i32
    %c0_i32_0 = arith.constant 0 : i32
    %c0_i32_1 = arith.constant 0 : i32
    return %arg0, %c0_i32, %c0_i32_0 : i32, i32, i32
  }
  func.func @transform_2(%arg0: i32) -> (i32, i32) {
    %c0_i32 = arith.constant 0 : i32
    %c0_i32_0 = arith.constant 0 : i32
    %c0_i32_1 = arith.constant 0 : i32
    return %c0_i32, %c0_i32_0 : i32, i32
  }
  func.func @transform_3(%arg0: i32) -> (i32, i32) {
    %c0_i32 = arith.constant 0 : i32
    %c0_i32_0 = arith.constant 0 : i32
    %c0_i32_1 = arith.constant 0 : i32
    return %c0_i32, %c0_i32_0 : i32, i32
  }
  func.func @transform_4(%arg0: i32) -> (i32, i32) {
    %c0_i32 = arith.constant 0 : i32
    %c0_i32_0 = arith.constant 0 : i32
    %c0_i32_1 = arith.constant 0 : i32
    return %c0_i32, %c0_i32_0 : i32, i32
  }
  func.func @transform_5(%arg0: i32) -> (i32, i32) {
    %c0_i32 = arith.constant 0 : i32
    %c0_i32_0 = arith.constant 0 : i32
    %c0_i32_1 = arith.constant 0 : i32
    return %c0_i32, %c0_i32_0 : i32, i32
  }
  func.func @transform_6(%arg0: i32) -> (i32, i32) {
    %c0_i32 = arith.constant 0 : i32
    %c0_i32_0 = arith.constant 0 : i32
    %c0_i32_1 = arith.constant 0 : i32
    return %c0_i32, %c0_i32_0 : i32, i32
  }
  func.func @transform_7(%arg0: i32) -> (i32, i32) {
    %c0_i32 = arith.constant 0 : i32
    %c0_i32_0 = arith.constant 0 : i32
    %c0_i32_1 = arith.constant 0 : i32
    return %c0_i32, %c0_i32_0 : i32, i32
  }
  func.func @transform_8(%arg0: i32) -> (i32, i32) {
    %c0_i32 = arith.constant 0 : i32
    %c0_i32_0 = arith.constant 0 : i32
    %c0_i32_1 = arith.constant 0 : i32
    return %c0_i32, %c0_i32_0 : i32, i32
  }
  func.func @transform_9(%arg0: i32) -> (i32, i32) {
    %c0_i32 = arith.constant 0 : i32
    %c0_i32_0 = arith.constant 0 : i32
    %c0_i32_1 = arith.constant 0 : i32
    return %c0_i32, %c0_i32_0 : i32, i32
  }
  func.func @transform_10(%arg0: i32) -> (i32, i32) {
    %c0_i32 = arith.constant 0 : i32
    %c0_i32_0 = arith.constant 0 : i32
    %c0_i32_1 = arith.constant 0 : i32
    return %c0_i32, %c0_i32_0 : i32, i32
  }
  func.func @transform_11(%arg0: i32) -> (i32, i32) {
    %c0_i32 = arith.constant 0 : i32
    %c0_i32_0 = arith.constant 0 : i32
    %c0_i32_1 = arith.constant 0 : i32
    return %c0_i32, %c0_i32_0 : i32, i32
  }
  func.func @transform_12(%arg0: i32) -> (i32, i32) {
    %c0_i32 = arith.constant 0 : i32
    %c0_i32_0 = arith.constant 0 : i32
    %c0_i32_1 = arith.constant 0 : i32
    return %c0_i32, %c0_i32_0 : i32, i32
  }
  func.func @transform_13(%arg0: i32) -> (i32, i32) {
    %c0_i32 = arith.constant 0 : i32
    %c0_i32_0 = arith.constant 0 : i32
    %c0_i32_1 = arith.constant 0 : i32
    return %c0_i32, %c0_i32_0 : i32, i32
  }
  func.func @transform_14(%arg0: i32) -> (i32, i32) {
    %c0_i32 = arith.constant 0 : i32
    %c0_i32_0 = arith.constant 0 : i32
    return %arg0, %c0_i32 : i32, i32
  }
  func.func @transform_15(%arg0: i32) -> (i32, i32) {
    %c0_i32 = arith.constant 0 : i32
    %c0_i32_0 = arith.constant 0 : i32
    %c0_i32_1 = arith.constant 0 : i32
    return %c0_i32, %c0_i32_0 : i32, i32
  }
}

</mosaic_0001>

<llo_original>
// kernel: tpu_custom_call.1
$region0: #{tpu_custom_call.1}
  #allocation0 [shape = 'u32[]', space=smem, size = 0x4, offset = 0x4, fixed_abs, tag = 'smem constant byte address 0x4 - core index']
  #allocation1 [shape = 'u32[144,128]{1,0:T(1,128)}', space=vmem, size = 0x12000, scoped, tag = 'internal scratch']
  #allocation2 [shape = 'f32[8,8,96]{2,1,0:T(8,128)}', space=vmem, size = 0x8000, scoped, tag = 'scratch operand']
  #allocation3 [shape = 'f32[8,8,32]{2,1,0:T(8,128)}', space=vmem, size = 0x8000, scoped, tag = 'scratch operand']
  #allocation4 [shape = 'f32[1,1]{1,0:T(1,128)S(1)}', space=vmem, size = 0x200, scoped, tag = 'scoped memory for tpu_custom_call.1']
  %s0 = inlined_call_operand.hbm [shape: f32[16,8,32], index: 0, kind: input, shape index: {}]
  %s1 = inlined_call_operand.hbm [shape: f32[16,8,32], index: 1, kind: input, shape index: {}]
  %s2 = inlined_call_operand.hbm [shape: f32[8,32], index: 2, kind: input, shape index: {}]
  %s3 = inlined_call_operand.hbm [shape: f32[32,32], index: 3, kind: input, shape index: {}]
  %s4 = inlined_call_operand.vmem [shape: f32[1,32], index: 4, kind: input, shape index: {}]
  %s5 = inlined_call_operand.hbm [shape: f32[32,32], index: 5, kind: input, shape index: {}]
  %s6 = inlined_call_operand.vmem [shape: f32[1,32], index: 6, kind: input, shape index: {}]
  %s7 = inlined_call_operand.hbm [shape: f32[32,96], index: 7, kind: input, shape index: {}]
  %s8 = inlined_call_operand.vmem [shape: f32[32,96], index: 8, kind: input, shape index: {}]
  %s9 = inlined_call_operand.vmem [shape: f32[1,96], index: 9, kind: input, shape index: {}]
  %s10 = inlined_call_operand.hbm [shape: f32[32,96], index: 10, kind: input, shape index: {}]
  %s11 = inlined_call_operand.vmem [shape: f32[1,96], index: 11, kind: input, shape index: {}]
  %s12 = inlined_call_operand.vmem [shape: f32[1,32], index: 12, kind: input, shape index: {}]
  %s13 = inlined_call_operand.<no memory space> [shape: f32[1,1], index: 13, kind: input, shape index: {}]
  %s14 = inlined_call_operand.vmem [shape: f32[16,8], index: 14, kind: output, shape index: {0}]
  %s15 = inlined_call_operand.hbm [shape: f32[8,32], index: 15, kind: output, shape index: {1}]
  %16 = xla_tuple %s14, %s15
  %s17 = sld [smem:[#allocation0]]
  $region129: #{tpu_custom_call.1} parent=0
    _
  %s19 = ssub.s32 1, %s17
  %s20 = scalar_select 0, %s19, %s17
  %v21 = vstv %s13
  %22 = vst [vmem:[#allocation4] sm:$0x1] %v21
  $region1: #{tpu_custom_call.1} parent=0
    #allocation5 [shape = 'u8[65536]{0}', space=vmem, size = 0x10000, scoped, tag = 'input window, operand 0']
    #allocation6 [shape = 's32[2]{0}', space=sflag, size = 0x8, scoped, tag = 'scoped memory for tpu_custom_call.1']
    #allocation7 [shape = 's32[2]{0}', space=sflag, size = 0x8, scoped, tag = 'scoped memory for tpu_custom_call.1']
    #allocation8 [shape = 'u8[65536]{0}', space=vmem, size = 0x10000, scoped, tag = 'input window, operand 1']
    #allocation9 [shape = 's32[2]{0}', space=sflag, size = 0x8, scoped, tag = 'scoped memory for tpu_custom_call.1']
    #allocation10 [shape = 'u8[4096]{0}', space=vmem, size = 0x1000, scoped, tag = 'input window, operand 2, single buffered']
    #allocation11 [shape = 'u8[16384]{0}', space=vmem, size = 0x4000, scoped, tag = 'input window, operand 3, single buffered']
    #allocation12 [shape = 's32[1]{0}', space=sflag, size = 0x4, scoped, tag = 'scoped memory for tpu_custom_call.1']
    #allocation13 [shape = 'u8[16384]{0}', space=vmem, size = 0x4000, scoped, tag = 'input window, operand 5, single buffered']
    #allocation14 [shape = 'u8[16384]{0}', space=vmem, size = 0x4000, scoped, tag = 'input window, operand 7, single buffered']
    #allocation15 [shape = 's32[1]{0}', space=sflag, size = 0x4, scoped, tag = 'scoped memory for tpu_custom_call.1']
    #allocation16 [shape = 'u8[16384]{0}', space=vmem, size = 0x4000, scoped, tag = 'input window, operand 10, single buffered']
    #allocation17 [shape = 'u8[4096]{0}', space=vmem, size = 0x1000, scoped, tag = 'output window, operand 1, single buffered']
    %23 = vsyncpa [#allocation6], 0
    %s24 = scalar_lea.sflag [#allocation6], 1
    %25 = vsyncpa %s24, 0
    %26 = vsyncpa [#allocation9], 0
    %s27 = scalar_lea.sflag [#allocation9], 1
    %28 = vsyncpa %s27, 0
    %29 = vsyncpa [#allocation12], 0
    %30 = vsyncpa [#allocation15], 0
    %31 = vsyncpa [#allocation7], 0
    loop: start=0, step=1, limit=4
    $region2: #{tpu_custom_call.1} parent=1 // loop_pre_header
      _
    $region3: #{tpu_custom_call.1} parent=1 // loop_header
      %s33 = sphi 0, %s37
      %p34 = scmp.ge.s32.totalorder %s33, 4
      %s43 = sphi 0, %s45
      %s46 = sphi 0, %s43
      %s47 = sphi 0, %s46
      %s63 = sphi 0, %s47
      %s69 = sphi 0, %s71
      %s72 = sphi 0, %s69
      %s73 = sphi 0, %s72
      %s89 = sphi 0, %s73
      %s93 = sphi 0, %s93
      %s95 = sphi 0, %s93
      %s96 = sphi 0, %s95
      %s110 = sphi 0, %s96
      %s114 = sphi 0, %s114
      %s116 = sphi 0, %s114
      %s117 = sphi 0, %s116
      %s131 = sphi 0, %s117
      %s135 = sphi 0, %s135
      %s137 = sphi 0, %s135
      %s138 = sphi 0, %s137
      %s152 = sphi 0, %s138
      %s156 = sphi 0, %s156
      %s158 = sphi 0, %s156
      %s159 = sphi 0, %s158
      %s173 = sphi 0, %s159
      %s177 = sphi 0, %s177
      %s179 = sphi 0, %s177
      %s180 = sphi 0, %s179
      %s194 = sphi 0, %s180
      %s198 = sphi 0, %s198
      %s200 = sphi 0, %s198
      %s201 = sphi 0, %s200
      %s215 = sphi 0, %s201
      %s219 = sphi 0, %s219
      %s221 = sphi 0, %s219
      %s222 = sphi 0, %s221
      %s236 = sphi 0, %s222
      %s240 = sphi 0, %s240
      %s242 = sphi 0, %s240
      %s243 = sphi 0, %s242
      %s257 = sphi 0, %s243
      %s261 = sphi 0, %s261
      %s263 = sphi 0, %s261
      %s264 = sphi 0, %s263
      %s278 = sphi 0, %s264
      %s282 = sphi 0, %s282
      %s284 = sphi 0, %s282
      %s285 = sphi 0, %s284
      %s299 = sphi 0, %s285
      %s303 = sphi 0, %s303
      %s305 = sphi 0, %s303
      %s306 = sphi 0, %s305
      %s320 = sphi 0, %s306
      %s324 = sphi 0, %s324
      %s326 = sphi 0, %s324
      %s327 = sphi 0, %s326
      %s341 = sphi 0, %s327
      %s347 = sphi 0, %s349
      %s350 = sphi 0, %s347
      %s351 = sphi 0, %s350
      %s367 = sphi 0, %s351
      %s371 = sphi 0, %s371
      %s373 = sphi 0, %s371
      %s374 = sphi 0, %s373
      %s388 = sphi 0, %s374
    $region4: #{tpu_custom_call.1} parent=1 // loop_header_branch
      %36 = sbr.rel (%p34) target = $region8
    $region5: #{tpu_custom_call.1} parent=1 // loop_body
      %s38 = ssub.s32 %s33, 1
      %s39 = ssub.s32 %s33, 2
      %s40 = sadd.s32 %s33, 1
      %s41 = ssub.s32 %s33, %s40
      %p42 = scmp.eq.s32.totalorder %s41, 0
      %s44 = sadd.s32 %s43, 1
      %s45 = scalar_select %p42, %s43, %s44
      %p48 = pneg %p42
      %p49 = scmp.eq.s32.totalorder %s33, 1
      %p50 = por %p48, %p49
      %p51 = scmp.ne.s32.totalorder %s43, %s46
      %p52 = scmp.eq.s32.totalorder %s33, 0
      %p53 = por %p51, %p52
      %p54 = scmp.ne.s32.totalorder %s43, %s46
      %p55 = scmp.eq.s32.totalorder %s38, 1
      %p56 = por %p54, %p55
      %p57 = scmp.ne.s32.totalorder %s46, %s47
      %p58 = scmp.eq.s32.totalorder %s38, 0
      %p59 = por %p57, %p58
      %p60 = scmp.ne.s32.totalorder %s46, %s47
      %p61 = scmp.eq.s32.totalorder %s39, 1
      %p62 = por %p60, %p61
      %p64 = scmp.ne.s32.totalorder %s47, %s63
      %p65 = scmp.eq.s32.totalorder %s39, 0
      %p66 = por %p64, %p65
      %s67 = ssub.s32 %s33, %s40
      %p68 = scmp.eq.s32.totalorder %s67, 0
      %s70 = sadd.s32 %s69, 1
      %s71 = scalar_select %p68, %s69, %s70
      %p74 = pneg %p68
      %p75 = scmp.eq.s32.totalorder %s33, 1
      %p76 = por %p74, %p75
      %p77 = scmp.ne.s32.totalorder %s69, %s72
      %p78 = scmp.eq.s32.totalorder %s33, 0
      %p79 = por %p77, %p78
      %p80 = scmp.ne.s32.totalorder %s69, %s72
      %p81 = scmp.eq.s32.totalorder %s38, 1
      %p82 = por %p80, %p81
      %p83 = scmp.ne.s32.totalorder %s72, %s73
      %p84 = scmp.eq.s32.totalorder %s38, 0
      %p85 = por %p83, %p84
      %p86 = scmp.ne.s32.totalorder %s72, %s73
      %p87 = scmp.eq.s32.totalorder %s39, 1
      %p88 = por %p86, %p87
      %p90 = scmp.ne.s32.totalorder %s73, %s89
      %p91 = scmp.eq.s32.totalorder %s39, 0
      %p92 = por %p90, %p91
      %s94 = sadd.s32 %s93, 1
      %p97 = scmp.eq.s32.totalorder %s33, 1
      %p98 = scmp.ne.s32.totalorder %s93, %s95
      %p99 = scmp.eq.s32.totalorder %s33, 0
      %p100 = por %p98, %p99
      %p101 = scmp.ne.s32.totalorder %s93, %s95
      %p102 = scmp.eq.s32.totalorder %s38, 1
      %p103 = por %p101, %p102
      %p104 = scmp.ne.s32.totalorder %s95, %s96
      %p105 = scmp.eq.s32.totalorder %s38, 0
      %p106 = por %p104, %p105
      %p107 = scmp.ne.s32.totalorder %s95, %s96
      %p108 = scmp.eq.s32.totalorder %s39, 1
      %p109 = por %p107, %p108
      %p111 = scmp.ne.s32.totalorder %s96, %s110
      %p112 = scmp.eq.s32.totalorder %s39, 0
      %p113 = por %p111, %p112
      %s115 = sadd.s32 %s114, 1
      %p118 = scmp.eq.s32.totalorder %s33, 1
      %p119 = scmp.ne.s32.totalorder %s114, %s116
      %p120 = scmp.eq.s32.totalorder %s33, 0
      %p121 = por %p119, %p120
      %p122 = scmp.ne.s32.totalorder %s114, %s116
      %p123 = scmp.eq.s32.totalorder %s38, 1
      %p124 = por %p122, %p123
      %p125 = scmp.ne.s32.totalorder %s116, %s117
      %p126 = scmp.eq.s32.totalorder %s38, 0
      %p127 = por %p125, %p126
      %p128 = scmp.ne.s32.totalorder %s116, %s117
      %p129 = scmp.eq.s32.totalorder %s39, 1
      %p130 = por %p128, %p129
      %p132 = scmp.ne.s32.totalorder %s117, %s131
      %p133 = scmp.eq.s32.totalorder %s39, 0
      %p134 = por %p132, %p133
      %s136 = sadd.s32 %s135, 1
      %p139 = scmp.eq.s32.totalorder %s33, 1
      %p140 = scmp.ne.s32.totalorder %s135, %s137
      %p141 = scmp.eq.s32.totalorder %s33, 0
      %p142 = por %p140, %p141
      %p143 = scmp.ne.s32.totalorder %s135, %s137
      %p144 = scmp.eq.s32.totalorder %s38, 1
      %p145 = por %p143, %p144
      %p146 = scmp.ne.s32.totalorder %s137, %s138
      %p147 = scmp.eq.s32.totalorder %s38, 0
      %p148 = por %p146, %p147
      %p149 = scmp.ne.s32.totalorder %s137, %s138
      %p150 = scmp.eq.s32.totalorder %s39, 1
      %p151 = por %p149, %p150
      %p153 = scmp.ne.s32.totalorder %s138, %s152
      %p154 = scmp.eq.s32.totalorder %s39, 0
      %p155 = por %p153, %p154
      %s157 = sadd.s32 %s156, 1
      %p160 = scmp.eq.s32.totalorder %s33, 1
      %p161 = scmp.ne.s32.totalorder %s156, %s158
      %p162 = scmp.eq.s32.totalorder %s33, 0
      %p163 = por %p161, %p162
      %p164 = scmp.ne.s32.totalorder %s156, %s158
      %p165 = scmp.eq.s32.totalorder %s38, 1
      %p166 = por %p164, %p165
      %p167 = scmp.ne.s32.totalorder %s158, %s159
      %p168 = scmp.eq.s32.totalorder %s38, 0
      %p169 = por %p167, %p168
      %p170 = scmp.ne.s32.totalorder %s158, %s159
      %p171 = scmp.eq.s32.totalorder %s39, 1
      %p172 = por %p170, %p171
      %p174 = scmp.ne.s32.totalorder %s159, %s173
      %p175 = scmp.eq.s32.totalorder %s39, 0
      %p176 = por %p174, %p175
      %s178 = sadd.s32 %s177, 1
      %p181 = scmp.eq.s32.totalorder %s33, 1
      %p182 = scmp.ne.s32.totalorder %s177, %s179
      %p183 = scmp.eq.s32.totalorder %s33, 0
      %p184 = por %p182, %p183
      %p185 = scmp.ne.s32.totalorder %s177, %s179
      %p186 = scmp.eq.s32.totalorder %s38, 1
      %p187 = por %p185, %p186
      %p188 = scmp.ne.s32.totalorder %s179, %s180
      %p189 = scmp.eq.s32.totalorder %s38, 0
      %p190 = por %p188, %p189
      %p191 = scmp.ne.s32.totalorder %s179, %s180
      %p192 = scmp.eq.s32.totalorder %s39, 1
      %p193 = por %p191, %p192
      %p195 = scmp.ne.s32.totalorder %s180, %s194
      %p196 = scmp.eq.s32.totalorder %s39, 0
      %p197 = por %p195, %p196
      %s199 = sadd.s32 %s198, 1
      %p202 = scmp.eq.s32.totalorder %s33, 1
      %p203 = scmp.ne.s32.totalorder %s198, %s200
      %p204 = scmp.eq.s32.totalorder %s33, 0
      %p205 = por %p203, %p204
      %p206 = scmp.ne.s32.totalorder %s198, %s200
      %p207 = scmp.eq.s32.totalorder %s38, 1
      %p208 = por %p206, %p207
      %p209 = scmp.ne.s32.totalorder %s200, %s201
      %p210 = scmp.eq.s32.totalorder %s38, 0
      %p211 = por %p209, %p210
      %p212 = scmp.ne.s32.totalorder %s200, %s201
      %p213 = scmp.eq.s32.totalorder %s39, 1
      %p214 = por %p212, %p213
      %p216 = scmp.ne.s32.totalorder %s201, %s215
      %p217 = scmp.eq.s32.totalorder %s39, 0
      %p218 = por %p216, %p217
      %s220 = sadd.s32 %s219, 1
      %p223 = scmp.eq.s32.totalorder %s33, 1
      %p224 = scmp.ne.s32.totalorder %s219, %s221
      %p225 = scmp.eq.s32.totalorder %s33, 0
      %p226 = por %p224, %p225
      %p227 = scmp.ne.s32.totalorder %s219, %s221
      %p228 = scmp.eq.s32.totalorder %s38, 1
      %p229 = por %p227, %p228
      %p230 = scmp.ne.s32.totalorder %s221, %s222
      %p231 = scmp.eq.s32.totalorder %s38, 0
      %p232 = por %p230, %p231
      %p233 = scmp.ne.s32.totalorder %s221, %s222
      %p234 = scmp.eq.s32.totalorder %s39, 1
      %p235 = por %p233, %p234
      %p237 = scmp.ne.s32.totalorder %s222, %s236
      %p238 = scmp.eq.s32.totalorder %s39, 0
      %p239 = por %p237, %p238
      %s241 = sadd.s32 %s240, 1
      %p244 = scmp.eq.s32.totalorder %s33, 1
      %p245 = scmp.ne.s32.totalorder %s240, %s242
      %p246 = scmp.eq.s32.totalorder %s33, 0
      %p247 = por %p245, %p246
      %p248 = scmp.ne.s32.totalorder %s240, %s242
      %p249 = scmp.eq.s32.totalorder %s38, 1
      %p250 = por %p248, %p249
      %p251 = scmp.ne.s32.totalorder %s242, %s243
      %p252 = scmp.eq.s32.totalorder %s38, 0
      %p253 = por %p251, %p252
      %p254 = scmp.ne.s32.totalorder %s242, %s243
      %p255 = scmp.eq.s32.totalorder %s39, 1
      %p256 = por %p254, %p255
      %p258 = scmp.ne.s32.totalorder %s243, %s257
      %p259 = scmp.eq.s32.totalorder %s39, 0
      %p260 = por %p258, %p259
      %s262 = sadd.s32 %s261, 1
      %p265 = scmp.eq.s32.totalorder %s33, 1
      %p266 = scmp.ne.s32.totalorder %s261, %s263
      %p267 = scmp.eq.s32.totalorder %s33, 0
      %p268 = por %p266, %p267
      %p269 = scmp.ne.s32.totalorder %s261, %s263
      %p270 = scmp.eq.s32.totalorder %s38, 1
      %p271 = por %p269, %p270
      %p272 = scmp.ne.s32.totalorder %s263, %s264
      %p273 = scmp.eq.s32.totalorder %s38, 0
      %p274 = por %p272, %p273
      %p275 = scmp.ne.s32.totalorder %s263, %s264
      %p276 = scmp.eq.s32.totalorder %s39, 1
      %p277 = por %p275, %p276
      %p279 = scmp.ne.s32.totalorder %s264, %s278
      %p280 = scmp.eq.s32.totalorder %s39, 0
      %p281 = por %p279, %p280
      %s283 = sadd.s32 %s282, 1
      %p286 = scmp.eq.s32.totalorder %s33, 1
      %p287 = scmp.ne.s32.totalorder %s282, %s284
      %p288 = scmp.eq.s32.totalorder %s33, 0
      %p289 = por %p287, %p288
      %p290 = scmp.ne.s32.totalorder %s282, %s284
      %p291 = scmp.eq.s32.totalorder %s38, 1
      %p292 = por %p290, %p291
      %p293 = scmp.ne.s32.totalorder %s284, %s285
      %p294 = scmp.eq.s32.totalorder %s38, 0
      %p295 = por %p293, %p294
      %p296 = scmp.ne.s32.totalorder %s284, %s285
      %p297 = scmp.eq.s32.totalorder %s39, 1
      %p298 = por %p296, %p297
      %p300 = scmp.ne.s32.totalorder %s285, %s299
      %p301 = scmp.eq.s32.totalorder %s39, 0
      %p302 = por %p300, %p301
      %s304 = sadd.s32 %s303, 1
      %p307 = scmp.eq.s32.totalorder %s33, 1
      %p308 = scmp.ne.s32.totalorder %s303, %s305
      %p309 = scmp.eq.s32.totalorder %s33, 0
      %p310 = por %p308, %p309
      %p311 = scmp.ne.s32.totalorder %s303, %s305
      %p312 = scmp.eq.s32.totalorder %s38, 1
      %p313 = por %p311, %p312
      %p314 = scmp.ne.s32.totalorder %s305, %s306
      %p315 = scmp.eq.s32.totalorder %s38, 0
      %p316 = por %p314, %p315
      %p317 = scmp.ne.s32.totalorder %s305, %s306
      %p318 = scmp.eq.s32.totalorder %s39, 1
      %p319 = por %p317, %p318
      %p321 = scmp.ne.s32.totalorder %s306, %s320
      %p322 = scmp.eq.s32.totalorder %s39, 0
      %p323 = por %p321, %p322
      %s325 = sadd.s32 %s324, 1
      %p328 = scmp.eq.s32.totalorder %s33, 1
      %p329 = scmp.ne.s32.totalorder %s324, %s326
      %p330 = scmp.eq.s32.totalorder %s33, 0
      %p331 = por %p329, %p330
      %p332 = scmp.ne.s32.totalorder %s324, %s326
      %p333 = scmp.eq.s32.totalorder %s38, 1
      %p334 = por %p332, %p333
      %p335 = scmp.ne.s32.totalorder %s326, %s327
      %p336 = scmp.eq.s32.totalorder %s38, 0
      %p337 = por %p335, %p336
      %p338 = scmp.ne.s32.totalorder %s326, %s327
      %p339 = scmp.eq.s32.totalorder %s39, 1
      %p340 = por %p338, %p339
      %p342 = scmp.ne.s32.totalorder %s327, %s341
      %p343 = scmp.eq.s32.totalorder %s39, 0
      %p344 = por %p342, %p343
      %s345 = ssub.s32 %s33, %s40
      %p346 = scmp.eq.s32.totalorder %s345, 0
      %s348 = sadd.s32 %s347, 1
      %s349 = scalar_select %p346, %s347, %s348
      %p352 = pneg %p346
      %p353 = scmp.eq.s32.totalorder %s33, 1
      %p354 = por %p352, %p353
      %p355 = scmp.ne.s32.totalorder %s347, %s350
      %p356 = scmp.eq.s32.totalorder %s33, 0
      %p357 = por %p355, %p356
      %p358 = scmp.ne.s32.totalorder %s347, %s350
      %p359 = scmp.eq.s32.totalorder %s38, 1
      %p360 = por %p358, %p359
      %p361 = scmp.ne.s32.totalorder %s350, %s351
      %p362 = scmp.eq.s32.totalorder %s38, 0
      %p363 = por %p361, %p362
      %p364 = scmp.ne.s32.totalorder %s350, %s351
      %p365 = scmp.eq.s32.totalorder %s39, 1
      %p366 = por %p364, %p365
      %p368 = scmp.ne.s32.totalorder %s351, %s367
      %p369 = scmp.eq.s32.totalorder %s39, 0
      %p370 = por %p368, %p369
      %s372 = sadd.s32 %s371, 1
      %p375 = scmp.eq.s32.totalorder %s33, 1
      %p376 = scmp.ne.s32.totalorder %s371, %s373
      %p377 = scmp.eq.s32.totalorder %s33, 0
      %p378 = por %p376, %p377
      %p379 = scmp.ne.s32.totalorder %s371, %s373
      %p380 = scmp.eq.s32.totalorder %s38, 1
      %p381 = por %p379, %p380
      %p382 = scmp.ne.s32.totalorder %s373, %s374
      %p383 = scmp.eq.s32.totalorder %s38, 0
      %p384 = por %p382, %p383
      %p385 = scmp.ne.s32.totalorder %s373, %s374
      %p386 = scmp.eq.s32.totalorder %s39, 1
      %p387 = por %p385, %p386
      %p389 = scmp.ne.s32.totalorder %s374, %s388
      %p390 = scmp.eq.s32.totalorder %s39, 0
      %p391 = por %p389, %p390
      %p392 = scmp.le.s32.totalorder 1, %s33
      %p393 = scmp.lt.s32.totalorder %s33, 3
      %p394 = pnand %p392, %p393
      %p395 = pneg %p394
      // Predicated region
      $region9: #{tpu_custom_call.1} parent=5 // pred_check
        _
      $region10: #{tpu_custom_call.1} parent=5 // pred_check_branch
        %397 = sbr.rel (%p394) target = $region12
      $region11: #{tpu_custom_call.1} parent=5 // pred_region
        %s398 = ssub.s32 %s33, 1
        // Predicated region
        $region13: #{tpu_custom_call.1} parent=11 // pred_check
          %p399 = pneg %p106
        $region14: #{tpu_custom_call.1} parent=11 // pred_check_branch
          %401 = sbr.rel (%p399) target = $region16
        $region15: #{tpu_custom_call.1} parent=11 // pred_region
          %s403 = ssub.s32 128, 128
          %404 = vsyncadd [#allocation9], %s403
          %s406 = sshll.u32 [#allocation10], 4
          %s407 = int_to_ptr.vmem [resolvable:$true] %s406
          %409 = dma.hbm_to_vmem [thread:$0]  %s2, 128, %s407, [#allocation9]
        $region16: #{tpu_custom_call.1} parent=11 // pred_fallthru
          _
        // Predicated region
        $region17: #{tpu_custom_call.1} parent=11 // pred_check
          %p410 = pneg %p127
        $region18: #{tpu_custom_call.1} parent=11 // pred_check_branch
          %412 = sbr.rel (%p410) target = $region20
        $region19: #{tpu_custom_call.1} parent=11 // pred_region
          %s414 = ssub.s32 512, 512
          %415 = vsyncadd [#allocation12], %s414
          %s416 = sshll.u32 [#allocation11], 4
          %s417 = int_to_ptr.vmem [resolvable:$true] %s416
          %422 = dma.hbm_to_vmem [thread:$0]  %s3, 512, %s417, [#allocation12], 128, 128, 8
        $region20: #{tpu_custom_call.1} parent=11 // pred_fallthru
          _
        // Predicated region
        $region21: #{tpu_custom_call.1} parent=11 // pred_check
          %p423 = pneg %p148
        $region22: #{tpu_custom_call.1} parent=11 // pred_check_branch
          %425 = sbr.rel (%p423) target = $region24
        $region23: #{tpu_custom_call.1} parent=11 // pred_region
          _
        $region24: #{tpu_custom_call.1} parent=11 // pred_fallthru
          _
        // Predicated region
        $region25: #{tpu_custom_call.1} parent=11 // pred_check
          %p426 = pneg %p169
        $region26: #{tpu_custom_call.1} parent=11 // pred_check_branch
          %428 = sbr.rel (%p426) target = $region28
        $region27: #{tpu_custom_call.1} parent=11 // pred_region
          %s430 = ssub.s32 512, 512
          %431 = vsyncadd [#allocation12], %s430
          %s432 = sshll.u32 [#allocation13], 4
          %s433 = int_to_ptr.vmem [resolvable:$true] %s432
          %438 = dma.hbm_to_vmem [thread:$0]  %s5, 512, %s433, [#allocation12], 128, 128, 8
        $region28: #{tpu_custom_call.1} parent=11 // pred_fallthru
          _
        // Predicated region
        $region29: #{tpu_custom_call.1} parent=11 // pred_check
          %p439 = pneg %p190
        $region30: #{tpu_custom_call.1} parent=11 // pred_check_branch
          %441 = sbr.rel (%p439) target = $region32
        $region31: #{tpu_custom_call.1} parent=11 // pred_region
          _
        $region32: #{tpu_custom_call.1} parent=11 // pred_fallthru
          _
        // Predicated region
        $region33: #{tpu_custom_call.1} parent=11 // pred_check
          %p442 = pneg %p211
        $region34: #{tpu_custom_call.1} parent=11 // pred_check_branch
          %444 = sbr.rel (%p442) target = $region36
        $region35: #{tpu_custom_call.1} parent=11 // pred_region
          %s446 = ssub.s32 512, 512
          %447 = vsyncadd [#allocation15], %s446
          %s448 = sshll.u32 [#allocation14], 4
          %s449 = int_to_ptr.vmem [resolvable:$true] %s448
          %454 = dma.hbm_to_vmem [thread:$0]  %s7, 512, %s449, [#allocation15], 128, 128, 8
        $region36: #{tpu_custom_call.1} parent=11 // pred_fallthru
          _
        // Predicated region
        $region37: #{tpu_custom_call.1} parent=11 // pred_check
          %p455 = pneg %p232
        $region38: #{tpu_custom_call.1} parent=11 // pred_check_branch
          %457 = sbr.rel (%p455) target = $region40
        $region39: #{tpu_custom_call.1} parent=11 // pred_region
          _
        $region40: #{tpu_custom_call.1} parent=11 // pred_fallthru
          _
        // Predicated region
        $region41: #{tpu_custom_call.1} parent=11 // pred_check
          %p458 = pneg %p253
        $region42: #{tpu_custom_call.1} parent=11 // pred_check_branch
          %460 = sbr.rel (%p458) target = $region44
        $region43: #{tpu_custom_call.1} parent=11 // pred_region
          _
        $region44: #{tpu_custom_call.1} parent=11 // pred_fallthru
          _
        // Predicated region
        $region45: #{tpu_custom_call.1} parent=11 // pred_check
          %p461 = pneg %p274
        $region46: #{tpu_custom_call.1} parent=11 // pred_check_branch
          %463 = sbr.rel (%p461) target = $region48
        $region47: #{tpu_custom_call.1} parent=11 // pred_region
          %s465 = ssub.s32 512, 512
          %466 = vsyncadd [#allocation15], %s465
          %s467 = sshll.u32 [#allocation16], 4
          %s468 = int_to_ptr.vmem [resolvable:$true] %s467
          %473 = dma.hbm_to_vmem [thread:$0]  %s10, 512, %s468, [#allocation15], 128, 128, 8
        $region48: #{tpu_custom_call.1} parent=11 // pred_fallthru
          _
        // Predicated region
        $region49: #{tpu_custom_call.1} parent=11 // pred_check
          %p474 = pneg %p295
        $region50: #{tpu_custom_call.1} parent=11 // pred_check_branch
          %476 = sbr.rel (%p474) target = $region52
        $region51: #{tpu_custom_call.1} parent=11 // pred_region
          _
        $region52: #{tpu_custom_call.1} parent=11 // pred_fallthru
          _
        // Predicated region
        $region53: #{tpu_custom_call.1} parent=11 // pred_check
          %p477 = pneg %p316
        $region54: #{tpu_custom_call.1} parent=11 // pred_check_branch
          %479 = sbr.rel (%p477) target = $region56
        $region55: #{tpu_custom_call.1} parent=11 // pred_region
          _
        $region56: #{tpu_custom_call.1} parent=11 // pred_fallthru
          _
        // Predicated region
        $region57: #{tpu_custom_call.1} parent=11 // pred_check
          %p480 = pneg %p337
        $region58: #{tpu_custom_call.1} parent=11 // pred_check_branch
          %482 = sbr.rel (%p480) target = $region60
        $region59: #{tpu_custom_call.1} parent=11 // pred_region
          _
        $region60: #{tpu_custom_call.1} parent=11 // pred_fallthru
          _
      $region12: #{tpu_custom_call.1} parent=5 // pred_fallthru
        _
      %p483 = scmp.lt.s32.totalorder %s33, 2
      // Predicated region
      $region61: #{tpu_custom_call.1} parent=5 // pred_check
        %p484 = pneg %p483
      $region62: #{tpu_custom_call.1} parent=5 // pred_check_branch
        %486 = sbr.rel (%p484) target = $region64
      $region63: #{tpu_custom_call.1} parent=5 // pred_region
        // Predicated region
        $region65: #{tpu_custom_call.1} parent=63 // pred_check
          %p487 = pneg %p53
        $region66: #{tpu_custom_call.1} parent=63 // pred_check_branch
          %489 = sbr.rel (%p487) target = $region68
        $region67: #{tpu_custom_call.1} parent=63 // pred_region
          %s490 = sand.u32 %s43, 1
          %s491 = scalar_lea.sflag [#allocation6], %s490
          %s492 = sand.u32 %s43, 1
          %s493 = smul.addr %s492, 64
          %s494 = scalar_lea.vmem [#allocation5], %s493
          %s495 = smul.u32 8, %s33
          %s497 = ssub.s32 1024, 1024
          %498 = vsyncadd %s491, %s497
          %s499 = smul.addr %s495, 128
          %s500 = scalar_lea.hbm %s0, %s499
          %s501 = sshll.u32 %s494, 4
          %s502 = int_to_ptr.vmem [resolvable:$true] %s501
          %507 = dma.hbm_to_vmem [thread:$0]  %s500, 1024, %s502, %s491, 128, 128, 8
        $region68: #{tpu_custom_call.1} parent=63 // pred_fallthru
          _
        // Predicated region
        $region69: #{tpu_custom_call.1} parent=63 // pred_check
          %p508 = pneg %p79
        $region70: #{tpu_custom_call.1} parent=63 // pred_check_branch
          %510 = sbr.rel (%p508) target = $region72
        $region71: #{tpu_custom_call.1} parent=63 // pred_region
          %s511 = sand.u32 %s33, 1
          %s512 = scalar_lea.sflag [#allocation9], %s511
          %s513 = sand.u32 %s69, 1
          %s514 = smul.addr %s513, 64
          %s515 = scalar_lea.vmem [#allocation8], %s514
          %s516 = smul.u32 8, %s33
          %s518 = ssub.s32 1024, 1024
          %519 = vsyncadd %s512, %s518
          %s520 = smul.addr %s516, 128
          %s521 = scalar_lea.hbm %s1, %s520
          %s522 = sshll.u32 %s515, 4
          %s523 = int_to_ptr.vmem [resolvable:$true] %s522
          %528 = dma.hbm_to_vmem [thread:$0]  %s521, 1024, %s523, %s512, 128, 128, 8
        $region72: #{tpu_custom_call.1} parent=63 // pred_fallthru
          _
      $region64: #{tpu_custom_call.1} parent=5 // pred_fallthru
        _
      %p529 = scmp.le.s32.totalorder 1, %s33
      %p530 = scmp.lt.s32.totalorder %s33, 3
      %p531 = pnand %p529, %p530
      %p532 = pneg %p531
      // Predicated region
      $region73: #{tpu_custom_call.1} parent=5 // pred_check
        _
      $region74: #{tpu_custom_call.1} parent=5 // pred_check_branch
        %534 = sbr.rel (%p531) target = $region76
      $region75: #{tpu_custom_call.1} parent=5 // pred_region
        %s535 = ssub.s32 %s33, 1
        %s536 = sand.u32 %s46, 1
        %s537 = scalar_lea.sflag [#allocation6], %s536
        %s538 = sand.u32 %s46, 1
        %s539 = smul.addr %s538, 64
        %s540 = scalar_lea.vmem [#allocation5], %s539
        // Predicated region
        $region77: #{tpu_custom_call.1} parent=75 // pred_check
          %p541 = pneg %p59
        $region78: #{tpu_custom_call.1} parent=75 // pred_check_branch
          %543 = sbr.rel (%p541) target = $region80
        $region79: #{tpu_custom_call.1} parent=75 // pred_region
          %544 = dma.done %s537, 1024
        $region80: #{tpu_custom_call.1} parent=75 // pred_fallthru
          _
        %s545 = sand.u32 %s38, 1
        %s546 = scalar_lea.sflag [#allocation9], %s545
        %s547 = sand.u32 %s72, 1
        %s548 = smul.addr %s547, 64
        %s549 = scalar_lea.vmem [#allocation8], %s548
        // Predicated region
        $region81: #{tpu_custom_call.1} parent=75 // pred_check
          %p550 = pneg %p85
        $region82: #{tpu_custom_call.1} parent=75 // pred_check_branch
          %552 = sbr.rel (%p550) target = $region84
        $region83: #{tpu_custom_call.1} parent=75 // pred_region
          %553 = dma.done %s546, 1024
        $region84: #{tpu_custom_call.1} parent=75 // pred_fallthru
          _
        // Predicated region
        $region85: #{tpu_custom_call.1} parent=75 // pred_check
          %p554 = pneg %p106
        $region86: #{tpu_custom_call.1} parent=75 // pred_check_branch
          %556 = sbr.rel (%p554) target = $region88
        $region87: #{tpu_custom_call.1} parent=75 // pred_region
          %557 = dma.done [#allocation9], 128
        $region88: #{tpu_custom_call.1} parent=75 // pred_fallthru
          _
        // Predicated region
        $region89: #{tpu_custom_call.1} parent=75 // pred_check
          %p558 = pneg %p127
        $region90: #{tpu_custom_call.1} parent=75 // pred_check_branch
          %560 = sbr.rel (%p558) target = $region92
        $region91: #{tpu_custom_call.1} parent=75 // pred_region
          %561 = dma.done [#allocation12], 512
        $region92: #{tpu_custom_call.1} parent=75 // pred_fallthru
          _
        // Predicated region
        $region93: #{tpu_custom_call.1} parent=75 // pred_check
          %p562 = pneg %p169
        $region94: #{tpu_custom_call.1} parent=75 // pred_check_branch
          %564 = sbr.rel (%p562) target = $region96
        $region95: #{tpu_custom_call.1} parent=75 // pred_region
          %565 = dma.done [#allocation12], 512
        $region96: #{tpu_custom_call.1} parent=75 // pred_fallthru
          _
        // Predicated region
        $region97: #{tpu_custom_call.1} parent=75 // pred_check
          %p566 = pneg %p211
        $region98: #{tpu_custom_call.1} parent=75 // pred_check_branch
          %568 = sbr.rel (%p566) target = $region100
        $region99: #{tpu_custom_call.1} parent=75 // pred_region
          %569 = dma.done [#allocation15], 512
        $region100: #{tpu_custom_call.1} parent=75 // pred_fallthru
          _
        // Predicated region
        $region101: #{tpu_custom_call.1} parent=75 // pred_check
          %p570 = pneg %p274
        $region102: #{tpu_custom_call.1} parent=75 // pred_check_branch
          %572 = sbr.rel (%p570) target = $region104
        $region103: #{tpu_custom_call.1} parent=75 // pred_region
          %573 = dma.done [#allocation15], 512
        $region104: #{tpu_custom_call.1} parent=75 // pred_fallthru
          _
        %s574 = sand.u32 %s46, 1
        %s575 = scalar_lea.sflag [#allocation6], %s574
        %s576 = sand.u32 %s46, 1
        %s577 = smul.addr %s576, 64
        %s578 = scalar_lea.vmem [#allocation5], %s577
        %p579 = pneg %p59
        %p580 = pneg %p56
        %s581 = sand.u32 %s38, 1
        %s582 = scalar_lea.sflag [#allocation9], %s581
        %s583 = sand.u32 %s72, 1
        %s584 = smul.addr %s583, 64
        %s585 = scalar_lea.vmem [#allocation8], %s584
        %p586 = pneg %p85
        %p587 = pneg %p82
        %p588 = pneg %p106
        %p589 = pneg %p103
        %p590 = pneg %p127
        %p591 = pneg %p124
        %p592 = pneg %p148
        %p593 = pneg %p145
        %p594 = pneg %p169
        %p595 = pneg %p166
        %p596 = pneg %p190
        %p597 = pneg %p187
        %p598 = pneg %p211
        %p599 = pneg %p208
        %p600 = pneg %p232
        %p601 = pneg %p229
        %p602 = pneg %p253
        %p603 = pneg %p250
        %p604 = pneg %p274
        %p605 = pneg %p271
        %p606 = pneg %p295
        %p607 = pneg %p292
        %p608 = pneg %p316
        %p609 = pneg %p313
        %p610 = pneg %p337
        %p611 = pneg %p334
        %p612 = pneg %p363
        %p613 = pneg %p360
        %p614 = scmp.lt.s32.totalorder %s38, 1
        %s615 = scalar_select %p614, %s38, 1
        %s616 = smul.addr %s615, 8
        %s617 = scalar_lea.vmem %s14, %s616
        %p618 = pneg %p384
        %p619 = pneg %p381
        %s620 = smul.u32 8, %s38
        %s621 = smul.u32 8, %s38
        %p622 = scmp.lt.s32.totalorder %s38, 1
        %s623 = scalar_select %p622, %s38, 1
        %s624 = smul.addr %s623, 8
        %s625 = scalar_lea.vmem %s14, %s624
        %p626 = scmp.eq.s32.totalorder %s38, 0
        // Predicated region
        $region105: #{tpu_custom_call.1} parent=75 // pred_check
          %p627 = pneg %p626
        $region106: #{tpu_custom_call.1} parent=75 // pred_check_branch
          %629 = sbr.rel (%p627) target = $region108
        $region107: #{tpu_custom_call.1} parent=75 // pred_region
          %v630 = vld [vmem:[#allocation10] sm:$0xff]
          %vm631 = vcmask 261120
          %632 = vst.msk [vmem:[#allocation17] sm:$0xff] %vm631, %v630
        $region108: #{tpu_custom_call.1} parent=75 // pred_fallthru
          _
        %v633 = vld [vmem:[%s540] sm:$0xff]
        %v634 = vld [vmem:[%s540 + $0x8] sm:$0xff]
        %v635 = vld [vmem:[%s540 + $0x10] sm:$0xff]
        %v636 = vld [vmem:[%s540 + $0x18] sm:$0xff]
        %v637 = vld [vmem:[%s540 + $0x20] sm:$0xff]
        %v638 = vld [vmem:[%s540 + $0x28] sm:$0xff]
        %v639 = vld [vmem:[%s540 + $0x30] sm:$0xff]
        %v640 = vld [vmem:[%s540 + $0x38] sm:$0xff]
        %v641 = vld [vmem:[%s549] sm:$0xff]
        %v642 = vld [vmem:[%s549 + $0x8] sm:$0xff]
        %v643 = vld [vmem:[%s549 + $0x10] sm:$0xff]
        %v644 = vld [vmem:[%s549 + $0x18] sm:$0xff]
        %v645 = vld [vmem:[%s549 + $0x20] sm:$0xff]
        %v646 = vld [vmem:[%s549 + $0x28] sm:$0xff]
        %v647 = vld [vmem:[%s549 + $0x30] sm:$0xff]
        %v648 = vld [vmem:[%s549 + $0x38] sm:$0xff]
        %v649 = vld [vmem:[#allocation11] sm:$0xff]
        %v650 = vld [vmem:[#allocation11 + $0x8] sm:$0xff]
        %v651 = vld [vmem:[#allocation11 + $0x10] sm:$0xff]
        %v652 = vld [vmem:[#allocation11 + $0x18] sm:$0xff]
        %v653 = vld [vmem:[%s4] sm:$0x1]
        %v655 = vlaneseq
        %v656 = vshrl.u32 %v655, 7
        %v657 = vsub.s32 0, %v656
        %v658 = vrot.slane %v653, %v657
        %vm660 = vcmask 261120
        %v662 = vsel %vm660, %v633, 0
        %v665 = vsel %vm660, %v634, 0
        %v668 = vsel %vm660, %v635, 0
        %v671 = vsel %vm660, %v636, 0
        %v674 = vsel %vm660, %v637, 0
        %v677 = vsel %vm660, %v638, 0
        %v680 = vsel %vm660, %v639, 0
        %v683 = vsel %vm660, %v640, 0
        %685 = vmatprep.subr.mxu0 0.0
        %686 = vmatpush1.msra.mxu0 %v649
        %687 = vmatprep.subr.mxu0 0.0
        %688 = vmatpush1.msra.mxu0 %v650
        %689 = vmatprep.subr.mxu0 0.0
        %690 = vmatpush1.msra.mxu0 %v651
        %691 = vmatprep.subr.mxu0 0.0
        %692 = vmatpush1.msra.mxu0 %v652
        %693 = vmatprep.subr.mxu0 0.0
        %694 = vmatpush1.msra.mxu0 0.0
        %695 = vmatprep.subr.mxu0 0.0
        %696 = vmatpush1.msra.mxu0 0.0
        %697 = vmatprep.subr.mxu0 0.0
        %698 = vmatpush1.msra.mxu0 0.0
        %699 = vmatprep.subr.mxu0 0.0
        %700 = vmatpush1.msra.mxu0 0.0
        %701 = vmatprep.subr.mxu0 0.0
        %702 = vmatpush1.msra.mxu0 0.0
        %703 = vmatprep.subr.mxu0 0.0
        %704 = vmatpush1.msra.mxu0 0.0
        %705 = vmatprep.subr.mxu0 0.0
        %706 = vmatpush1.msra.mxu0 0.0
        %707 = vmatprep.subr.mxu0 0.0
        %708 = vmatpush1.msra.mxu0 0.0
        %709 = vmatprep.subr.mxu0 0.0
        %710 = vmatpush1.msra.mxu0 0.0
        %711 = vmatprep.subr.mxu0 0.0
        %712 = vmatpush1.msra.mxu0 0.0
        %713 = vmatprep.subr.mxu0 0.0
        %714 = vmatpush1.msra.mxu0 0.0
        %715 = vmatprep.subr.mxu0 0.0
        %716 = vmatpush1.msra.mxu0 0.0
        %717 = vmatprep.subr.mxu0 0.0
        %718 = vmatpush1.msra.mxu0 0.0
        %719 = vmatprep.subr.mxu0 0.0
        %720 = vmatpush1.msra.mxu0 0.0
        %721 = vmatprep.subr.mxu0 0.0
        %722 = vmatpush1.msra.mxu0 0.0
        %723 = vmatprep.subr.mxu0 0.0
        %724 = vmatpush1.msra.mxu0 0.0
        %725 = vmatprep.subr.mxu0 0.0
        %726 = vmatpush1.msra.mxu0 0.0
        %727 = vmatprep.subr.mxu0 0.0
        %728 = vmatpush1.msra.mxu0 0.0
        %729 = vmatprep.subr.mxu0 0.0
        %730 = vmatpush1.msra.mxu0 0.0
        %731 = vmatprep.subr.mxu0 0.0
        %732 = vmatpush1.msra.mxu0 0.0
        %733 = vmatprep.subr.mxu0 0.0
        %734 = vmatpush1.msra.mxu0 0.0
        %735 = vmatprep.subr.mxu0 0.0
        %736 = vmatpush1.msra.mxu0 0.0
        %737 = vmatprep.subr.mxu0 0.0
        %738 = vmatpush1.msra.mxu0 0.0
        %739 = vmatprep.subr.mxu0 0.0
        %740 = vmatpush1.msra.mxu0 0.0
        %741 = vmatprep.subr.mxu0 0.0
        %742 = vmatpush1.msra.mxu0 0.0
        %743 = vmatprep.subr.mxu0 0.0
        %744 = vmatpush1.msra.mxu0 0.0
        %745 = vmatprep.subr.mxu0 0.0
        %746 = vmatpush1.msra.mxu0 0.0
        %747 = vmatprep.subr.mxu0 0.0
        %748 = vmatpush1.msra.mxu0 0.0
        %749 = vmatprep.mubr.f32.mxu0 0.0
        %750 = vmatmul.mubr.f32.gmra.mrb[0].mxu0 %v662
        %v751 = vpop.f32.mrb[0].mxu0
        %v752 = vadd.f32 %v658, %v751
        %v753 = vpop.f32.mrb[0].mxu0
        %754 = vmatprep.mubr.f32.mxu0 0.0
        %755 = vmatmul.mubr.f32.gmra.mrb[0].mxu0 %v665
        %v756 = vpop.f32.mrb[0].mxu0
        %v757 = vadd.f32 %v658, %v756
        %v758 = vpop.f32.mrb[0].mxu0
        %759 = vmatprep.mubr.f32.mxu0 0.0
        %760 = vmatmul.mubr.f32.gmra.mrb[0].mxu0 %v668
        %v761 = vpop.f32.mrb[0].mxu0
        %v762 = vadd.f32 %v658, %v761
        %v763 = vpop.f32.mrb[0].mxu0
        %764 = vmatprep.mubr.f32.mxu0 0.0
        %765 = vmatmul.mubr.f32.gmra.mrb[0].mxu0 %v671
        %v766 = vpop.f32.mrb[0].mxu0
        %v767 = vadd.f32 %v658, %v766
        %v768 = vpop.f32.mrb[0].mxu0
        %769 = vmatprep.mubr.f32.mxu0 0.0
        %770 = vmatmul.mubr.f32.gmra.mrb[0].mxu0 %v674
        %v771 = vpop.f32.mrb[0].mxu0
        %v772 = vadd.f32 %v658, %v771
        %v773 = vpop.f32.mrb[0].mxu0
        %774 = vmatprep.mubr.f32.mxu0 0.0
        %775 = vmatmul.mubr.f32.gmra.mrb[0].mxu0 %v677
        %v776 = vpop.f32.mrb[0].mxu0
        %v777 = vadd.f32 %v658, %v776
        %v778 = vpop.f32.mrb[0].mxu0
        %779 = vmatprep.mubr.f32.mxu0 0.0
        %780 = vmatmul.mubr.f32.gmra.mrb[0].mxu0 %v680
        %v781 = vpop.f32.mrb[0].mxu0
        %v782 = vadd.f32 %v658, %v781
        %v783 = vpop.f32.mrb[0].mxu0
        %784 = vmatprep.mubr.f32.mxu0 0.0
        %785 = vmatmul.mubr.f32.gmra.mrb[0].mxu0 %v683
        %v786 = vpop.f32.mrb[0].mxu0
        %v787 = vadd.f32 %v658, %v786
        %v788 = vpop.f32.mrb[0].mxu0
        %789 = vdwg.mxu0
        %v790 = vmax.f32 %v752, 0.0
        %v791 = vmax.f32 %v757, 0.0
        %v792 = vmax.f32 %v762, 0.0
        %v793 = vmax.f32 %v767, 0.0
        %v794 = vmax.f32 %v772, 0.0
        %v795 = vmax.f32 %v777, 0.0
        %v796 = vmax.f32 %v782, 0.0
        %v797 = vmax.f32 %v787, 0.0
        %v798 = vld [vmem:[#allocation13] sm:$0xff]
        %v799 = vld [vmem:[#allocation13 + $0x8] sm:$0xff]
        %v800 = vld [vmem:[#allocation13 + $0x10] sm:$0xff]
        %v801 = vld [vmem:[#allocation13 + $0x18] sm:$0xff]
        %v802 = vld [vmem:[%s6] sm:$0x1]
        %v804 = vlaneseq
        %v805 = vshrl.u32 %v804, 7
        %v806 = vsub.s32 0, %v805
        %v807 = vrot.slane %v802, %v806
        %v810 = vsel %vm660, %v641, 0
        %v813 = vsel %vm660, %v642, 0
        %v816 = vsel %vm660, %v643, 0
        %v819 = vsel %vm660, %v644, 0
        %v822 = vsel %vm660, %v645, 0
        %v825 = vsel %vm660, %v646, 0
        %v828 = vsel %vm660, %v647, 0
        %v831 = vsel %vm660, %v648, 0
        %833 = vmatprep.subr.mxu0 0.0
        %834 = vmatpush1.msra.mxu0 %v798
        %835 = vmatprep.subr.mxu0 0.0
        %836 = vmatpush1.msra.mxu0 %v799
        %837 = vmatprep.subr.mxu0 0.0
        %838 = vmatpush1.msra.mxu0 %v800
        %839 = vmatprep.subr.mxu0 0.0
        %840 = vmatpush1.msra.mxu0 %v801
        %841 = vmatprep.subr.mxu0 0.0
        %842 = vmatpush1.msra.mxu0 0.0
        %843 = vmatprep.subr.mxu0 0.0
        %844 = vmatpush1.msra.mxu0 0.0
        %845 = vmatprep.subr.mxu0 0.0
        %846 = vmatpush1.msra.mxu0 0.0
        %847 = vmatprep.subr.mxu0 0.0
        %848 = vmatpush1.msra.mxu0 0.0
        %849 = vmatprep.subr.mxu0 0.0
        %850 = vmatpush1.msra.mxu0 0.0
        %851 = vmatprep.subr.mxu0 0.0
        %852 = vmatpush1.msra.mxu0 0.0
        %853 = vmatprep.subr.mxu0 0.0
        %854 = vmatpush1.msra.mxu0 0.0
        %855 = vmatprep.subr.mxu0 0.0
        %856 = vmatpush1.msra.mxu0 0.0
        %857 = vmatprep.subr.mxu0 0.0
        %858 = vmatpush1.msra.mxu0 0.0
        %859 = vmatprep.subr.mxu0 0.0
        %860 = vmatpush1.msra.mxu0 0.0
        %861 = vmatprep.subr.mxu0 0.0
        %862 = vmatpush1.msra.mxu0 0.0
        %863 = vmatprep.subr.mxu0 0.0
        %864 = vmatpush1.msra.mxu0 0.0
        %865 = vmatprep.subr.mxu0 0.0
        %866 = vmatpush1.msra.mxu0 0.0
        %867 = vmatprep.subr.mxu0 0.0
        %868 = vmatpush1.msra.mxu0 0.0
        %869 = vmatprep.subr.mxu0 0.0
        %870 = vmatpush1.msra.mxu0 0.0
        %871 = vmatprep.subr.mxu0 0.0
        %872 = vmatpush1.msra.mxu0 0.0
        %873 = vmatprep.subr.mxu0 0.0
        %874 = vmatpush1.msra.mxu0 0.0
        %875 = vmatprep.subr.mxu0 0.0
        %876 = vmatpush1.msra.mxu0 0.0
        %877 = vmatprep.subr.mxu0 0.0
        %878 = vmatpush1.msra.mxu0 0.0
        %879 = vmatprep.subr.mxu0 0.0
        %880 = vmatpush1.msra.mxu0 0.0
        %881 = vmatprep.subr.mxu0 0.0
        %882 = vmatpush1.msra.mxu0 0.0
        %883 = vmatprep.subr.mxu0 0.0
        %884 = vmatpush1.msra.mxu0 0.0
        %885 = vmatprep.subr.mxu0 0.0
        %886 = vmatpush1.msra.mxu0 0.0
        %887 = vmatprep.subr.mxu0 0.0
        %888 = vmatpush1.msra.mxu0 0.0
        %889 = vmatprep.subr.mxu0 0.0
        %890 = vmatpush1.msra.mxu0 0.0
        %891 = vmatprep.subr.mxu0 0.0
        %892 = vmatpush1.msra.mxu0 0.0
        %893 = vmatprep.subr.mxu0 0.0
        %894 = vmatpush1.msra.mxu0 0.0
        %895 = vmatprep.subr.mxu0 0.0
        %896 = vmatpush1.msra.mxu0 0.0
        %897 = vmatprep.mubr.f32.mxu0 0.0
        %898 = vmatmul.mubr.f32.gmra.mrb[0].mxu0 %v810
        %v899 = vpop.f32.mrb[0].mxu0
        %v900 = vadd.f32 %v807, %v899
        %v901 = vpop.f32.mrb[0].mxu0
        %902 = vmatprep.mubr.f32.mxu0 0.0
        %903 = vmatmul.mubr.f32.gmra.mrb[0].mxu0 %v813
        %v904 = vpop.f32.mrb[0].mxu0
        %v905 = vadd.f32 %v807, %v904
        %v906 = vpop.f32.mrb[0].mxu0
        %907 = vmatprep.mubr.f32.mxu0 0.0
        %908 = vmatmul.mubr.f32.gmra.mrb[0].mxu0 %v816
        %v909 = vpop.f32.mrb[0].mxu0
        %v910 = vadd.f32 %v807, %v909
        %v911 = vpop.f32.mrb[0].mxu0
        %912 = vmatprep.mubr.f32.mxu0 0.0
        %913 = vmatmul.mubr.f32.gmra.mrb[0].mxu0 %v819
        %v914 = vpop.f32.mrb[0].mxu0
        %v915 = vadd.f32 %v807, %v914
        %v916 = vpop.f32.mrb[0].mxu0
        %917 = vmatprep.mubr.f32.mxu0 0.0
        %918 = vmatmul.mubr.f32.gmra.mrb[0].mxu0 %v822
        %v919 = vpop.f32.mrb[0].mxu0
        %v920 = vadd.f32 %v807, %v919
        %v921 = vpop.f32.mrb[0].mxu0
        %922 = vmatprep.mubr.f32.mxu0 0.0
        %923 = vmatmul.mubr.f32.gmra.mrb[0].mxu0 %v825
        %v924 = vpop.f32.mrb[0].mxu0
        %v925 = vadd.f32 %v807, %v924
        %v926 = vpop.f32.mrb[0].mxu0
        %927 = vmatprep.mubr.f32.mxu0 0.0
        %928 = vmatmul.mubr.f32.gmra.mrb[0].mxu0 %v828
        %v929 = vpop.f32.mrb[0].mxu0
        %v930 = vadd.f32 %v807, %v929
        %v931 = vpop.f32.mrb[0].mxu0
        %932 = vmatprep.mubr.f32.mxu0 0.0
        %933 = vmatmul.mubr.f32.gmra.mrb[0].mxu0 %v831
        %v934 = vpop.f32.mrb[0].mxu0
        %v935 = vadd.f32 %v807, %v934
        %v936 = vpop.f32.mrb[0].mxu0
        %937 = vdwg.mxu0
        %v938 = vmax.f32 %v900, 0.0
        %v939 = vmax.f32 %v905, 0.0
        %v940 = vmax.f32 %v910, 0.0
        %v941 = vmax.f32 %v915, 0.0
        %v942 = vmax.f32 %v920, 0.0
        %v943 = vmax.f32 %v925, 0.0
        %v944 = vmax.f32 %v930, 0.0
        %v945 = vmax.f32 %v935, 0.0
        %v946 = vld [vmem:[#allocation14] sm:$0xff]
        %v947 = vld [vmem:[#allocation14 + $0x8] sm:$0xff]
        %v948 = vld [vmem:[#allocation14 + $0x10] sm:$0xff]
        %v949 = vld [vmem:[#allocation14 + $0x18] sm:$0xff]
        %v950 = vld [vmem:[%s8] sm:$0xff]
        %v951 = vld [vmem:[%s8 + $0x8] sm:$0xff]
        %v952 = vld [vmem:[%s8 + $0x10] sm:$0xff]
        %v953 = vld [vmem:[%s8 + $0x18] sm:$0xff]
        %v955 = vsel %vm660, %v938, 0
        %v958 = vsel %vm660, %v939, 0
        %v961 = vsel %vm660, %v940, 0
        %v964 = vsel %vm660, %v941, 0
        %v967 = vsel %vm660, %v942, 0
        %v970 = vsel %vm660, %v943, 0
        %v973 = vsel %vm660, %v944, 0
        %v976 = vsel %vm660, %v945, 0
        %978 = vmatprep.subr.mxu0 0.0
        %979 = vmatpush1.msra.mxu0 %v950
        %980 = vmatprep.subr.mxu0 0.0
        %981 = vmatpush1.msra.mxu0 %v951
        %982 = vmatprep.subr.mxu0 0.0
        %983 = vmatpush1.msra.mxu0 %v952
        %984 = vmatprep.subr.mxu0 0.0
        %985 = vmatpush1.msra.mxu0 %v953
        %986 = vmatprep.subr.mxu0 0.0
        %987 = vmatpush1.msra.mxu0 0.0
        %988 = vmatprep.subr.mxu0 0.0
        %989 = vmatpush1.msra.mxu0 0.0
        %990 = vmatprep.subr.mxu0 0.0
        %991 = vmatpush1.msra.mxu0 0.0
        %992 = vmatprep.subr.mxu0 0.0
        %993 = vmatpush1.msra.mxu0 0.0
        %994 = vmatprep.subr.mxu0 0.0
        %995 = vmatpush1.msra.mxu0 0.0
        %996 = vmatprep.subr.mxu0 0.0
        %997 = vmatpush1.msra.mxu0 0.0
        %998 = vmatprep.subr.mxu0 0.0
        %999 = vmatpush1.msra.mxu0 0.0
        %1000 = vmatprep.subr.mxu0 0.0
        %1001 = vmatpush1.msra.mxu0 0.0
        %1002 = vmatprep.subr.mxu0 0.0
        %1003 = vmatpush1.msra.mxu0 0.0
        %1004 = vmatprep.subr.mxu0 0.0
        %1005 = vmatpush1.msra.mxu0 0.0
        %1006 = vmatprep.subr.mxu0 0.0
        %1007 = vmatpush1.msra.mxu0 0.0
        %1008 = vmatprep.subr.mxu0 0.0
        %1009 = vmatpush1.msra.mxu0 0.0
        %1010 = vmatprep.subr.mxu0 0.0
        %1011 = vmatpush1.msra.mxu0 0.0
        %1012 = vmatprep.subr.mxu0 0.0
        %1013 = vmatpush1.msra.mxu0 0.0
        %1014 = vmatprep.subr.mxu0 0.0
        %1015 = vmatpush1.msra.mxu0 0.0
        %1016 = vmatprep.subr.mxu0 0.0
        %1017 = vmatpush1.msra.mxu0 0.0
        %1018 = vmatprep.subr.mxu0 0.0
        %1019 = vmatpush1.msra.mxu0 0.0
        %1020 = vmatprep.subr.mxu0 0.0
        %1021 = vmatpush1.msra.mxu0 0.0
        %1022 = vmatprep.subr.mxu0 0.0
        %1023 = vmatpush1.msra.mxu0 0.0
        %1024 = vmatprep.subr.mxu0 0.0
        %1025 = vmatpush1.msra.mxu0 0.0
        %1026 = vmatprep.subr.mxu0 0.0
        %1027 = vmatpush1.msra.mxu0 0.0
        %1028 = vmatprep.subr.mxu0 0.0
        %1029 = vmatpush1.msra.mxu0 0.0
        %1030 = vmatprep.subr.mxu0 0.0
        %1031 = vmatpush1.msra.mxu0 0.0
        %1032 = vmatprep.subr.mxu0 0.0
        %1033 = vmatpush1.msra.mxu0 0.0
        %1034 = vmatprep.subr.mxu0 0.0
        %1035 = vmatpush1.msra.mxu0 0.0
        %1036 = vmatprep.subr.mxu0 0.0
        %1037 = vmatpush1.msra.mxu0 0.0
        %1038 = vmatprep.subr.mxu0 0.0
        %1039 = vmatpush1.msra.mxu0 0.0
        %1040 = vmatprep.subr.mxu0 0.0
        %1041 = vmatpush1.msra.mxu0 0.0
        %1042 = vmatprep.mubr.f32.mxu0 0.0
        %1043 = vmatmul.mubr.f32.gmra.mrb[0].mxu0 %v955
        %v1044 = vpop.f32.mrb[0].mxu0
        %v1045 = vadd.f32 0.0, %v1044
        %v1046 = vpop.f32.mrb[0].mxu0
        %1047 = vmatprep.mubr.f32.mxu0 0.0
        %1048 = vmatmul.mubr.f32.gmra.mrb[0].mxu0 %v958
        %v1049 = vpop.f32.mrb[0].mxu0
        %v1050 = vadd.f32 0.0, %v1049
        %v1051 = vpop.f32.mrb[0].mxu0
        %1052 = vmatprep.mubr.f32.mxu0 0.0
        %1053 = vmatmul.mubr.f32.gmra.mrb[0].mxu0 %v961
        %v1054 = vpop.f32.mrb[0].mxu0
        %v1055 = vadd.f32 0.0, %v1054
        %v1056 = vpop.f32.mrb[0].mxu0
        %1057 = vmatprep.mubr.f32.mxu0 0.0
        %1058 = vmatmul.mubr.f32.gmra.mrb[0].mxu0 %v964
        %v1059 = vpop.f32.mrb[0].mxu0
        %v1060 = vadd.f32 0.0, %v1059
        %v1061 = vpop.f32.mrb[0].mxu0
        %1062 = vmatprep.mubr.f32.mxu0 0.0
        %1063 = vmatmul.mubr.f32.gmra.mrb[0].mxu0 %v967
        %v1064 = vpop.f32.mrb[0].mxu0
        %v1065 = vadd.f32 0.0, %v1064
        %v1066 = vpop.f32.mrb[0].mxu0
        %1067 = vmatprep.mubr.f32.mxu0 0.0
        %1068 = vmatmul.mubr.f32.gmra.mrb[0].mxu0 %v970
        %v1069 = vpop.f32.mrb[0].mxu0
        %v1070 = vadd.f32 0.0, %v1069
        %v1071 = vpop.f32.mrb[0].mxu0
        %1072 = vmatprep.mubr.f32.mxu0 0.0
        %1073 = vmatmul.mubr.f32.gmra.mrb[0].mxu0 %v973
        %v1074 = vpop.f32.mrb[0].mxu0
        %v1075 = vadd.f32 0.0, %v1074
        %v1076 = vpop.f32.mrb[0].mxu0
        %1077 = vmatprep.mubr.f32.mxu0 0.0
        %1078 = vmatmul.mubr.f32.gmra.mrb[0].mxu0 %v976
        %v1079 = vpop.f32.mrb[0].mxu0
        %v1080 = vadd.f32 0.0, %v1079
        %v1081 = vpop.f32.mrb[0].mxu0
        %1082 = vdwg.mxu0
        %v1084 = vsel %vm660, %v790, 0
        %v1087 = vsel %vm660, %v791, 0
        %v1090 = vsel %vm660, %v792, 0
        %v1093 = vsel %vm660, %v793, 0
        %v1096 = vsel %vm660, %v794, 0
        %v1099 = vsel %vm660, %v795, 0
        %v1102 = vsel %vm660, %v796, 0
        %v1105 = vsel %vm660, %v797, 0
        %1107 = vmatprep.subr.mxu0 0.0
        %1108 = vmatpush1.msra.mxu0 %v946
        %1109 = vmatprep.subr.mxu0 0.0
        %1110 = vmatpush1.msra.mxu0 %v947
        %1111 = vmatprep.subr.mxu0 0.0
        %1112 = vmatpush1.msra.mxu0 %v948
        %1113 = vmatprep.subr.mxu0 0.0
        %1114 = vmatpush1.msra.mxu0 %v949
        %1115 = vmatprep.subr.mxu0 0.0
        %1116 = vmatpush1.msra.mxu0 0.0
        %1117 = vmatprep.subr.mxu0 0.0
        %1118 = vmatpush1.msra.mxu0 0.0
        %1119 = vmatprep.subr.mxu0 0.0
        %1120 = vmatpush1.msra.mxu0 0.0
        %1121 = vmatprep.subr.mxu0 0.0
        %1122 = vmatpush1.msra.mxu0 0.0
        %1123 = vmatprep.subr.mxu0 0.0
        %1124 = vmatpush1.msra.mxu0 0.0
        %1125 = vmatprep.subr.mxu0 0.0
        %1126 = vmatpush1.msra.mxu0 0.0
        %1127 = vmatprep.subr.mxu0 0.0
        %1128 = vmatpush1.msra.mxu0 0.0
        %1129 = vmatprep.subr.mxu0 0.0
        %1130 = vmatpush1.msra.mxu0 0.0
        %1131 = vmatprep.subr.mxu0 0.0
        %1132 = vmatpush1.msra.mxu0 0.0
        %1133 = vmatprep.subr.mxu0 0.0
        %1134 = vmatpush1.msra.mxu0 0.0
        %1135 = vmatprep.subr.mxu0 0.0
        %1136 = vmatpush1.msra.mxu0 0.0
        %1137 = vmatprep.subr.mxu0 0.0
        %1138 = vmatpush1.msra.mxu0 0.0
        %1139 = vmatprep.subr.mxu0 0.0
        %1140 = vmatpush1.msra.mxu0 0.0
        %1141 = vmatprep.subr.mxu0 0.0
        %1142 = vmatpush1.msra.mxu0 0.0
        %1143 = vmatprep.subr.mxu0 0.0
        %1144 = vmatpush1.msra.mxu0 0.0
        %1145 = vmatprep.subr.mxu0 0.0
        %1146 = vmatpush1.msra.mxu0 0.0
        %1147 = vmatprep.subr.mxu0 0.0
        %1148 = vmatpush1.msra.mxu0 0.0
        %1149 = vmatprep.subr.mxu0 0.0
        %1150 = vmatpush1.msra.mxu0 0.0
        %1151 = vmatprep.subr.mxu0 0.0
        %1152 = vmatpush1.msra.mxu0 0.0
        %1153 = vmatprep.subr.mxu0 0.0
        %1154 = vmatpush1.msra.mxu0 0.0
        %1155 = vmatprep.subr.mxu0 0.0
        %1156 = vmatpush1.msra.mxu0 0.0
        %1157 = vmatprep.subr.mxu0 0.0
        %1158 = vmatpush1.msra.mxu0 0.0
        %1159 = vmatprep.subr.mxu0 0.0
        %1160 = vmatpush1.msra.mxu0 0.0
        %1161 = vmatprep.subr.mxu0 0.0
        %1162 = vmatpush1.msra.mxu0 0.0
        %1163 = vmatprep.subr.mxu0 0.0
        %1164 = vmatpush1.msra.mxu0 0.0
        %1165 = vmatprep.subr.mxu0 0.0
        %1166 = vmatpush1.msra.mxu0 0.0
        %1167 = vmatprep.subr.mxu0 0.0
        %1168 = vmatpush1.msra.mxu0 0.0
        %1169 = vmatprep.subr.mxu0 0.0
        %1170 = vmatpush1.msra.mxu0 0.0
        %1171 = vmatprep.mubr.f32.mxu0 0.0
        %1172 = vmatmul.mubr.f32.gmra.mrb[0].mxu0 %v1084
        %v1173 = vpop.f32.mrb[0].mxu0
        %v1174 = vadd.f32 %v1045, %v1173
        %v1175 = vpop.f32.mrb[0].mxu0
        %1176 = vmatprep.mubr.f32.mxu0 0.0
        %1177 = vmatmul.mubr.f32.gmra.mrb[0].mxu0 %v1087
        %v1178 = vpop.f32.mrb[0].mxu0
        %v1179 = vadd.f32 %v1050, %v1178
        %v1180 = vpop.f32.mrb[0].mxu0
        %1181 = vmatprep.mubr.f32.mxu0 0.0
        %1182 = vmatmul.mubr.f32.gmra.mrb[0].mxu0 %v1090
        %v1183 = vpop.f32.mrb[0].mxu0
        %v1184 = vadd.f32 %v1055, %v1183
        %v1185 = vpop.f32.mrb[0].mxu0
        %1186 = vmatprep.mubr.f32.mxu0 0.0
        %1187 = vmatmul.mubr.f32.gmra.mrb[0].mxu0 %v1093
        %v1188 = vpop.f32.mrb[0].mxu0
        %v1189 = vadd.f32 %v1060, %v1188
        %v1190 = vpop.f32.mrb[0].mxu0
        %1191 = vmatprep.mubr.f32.mxu0 0.0
        %1192 = vmatmul.mubr.f32.gmra.mrb[0].mxu0 %v1096
        %v1193 = vpop.f32.mrb[0].mxu0
        %v1194 = vadd.f32 %v1065, %v1193
        %v1195 = vpop.f32.mrb[0].mxu0
        %1196 = vmatprep.mubr.f32.mxu0 0.0
        %1197 = vmatmul.mubr.f32.gmra.mrb[0].mxu0 %v1099
        %v1198 = vpop.f32.mrb[0].mxu0
        %v1199 = vadd.f32 %v1070, %v1198
        %v1200 = vpop.f32.mrb[0].mxu0
        %1201 = vmatprep.mubr.f32.mxu0 0.0
        %1202 = vmatmul.mubr.f32.gmra.mrb[0].mxu0 %v1102
        %v1203 = vpop.f32.mrb[0].mxu0
        %v1204 = vadd.f32 %v1075, %v1203
        %v1205 = vpop.f32.mrb[0].mxu0
        %1206 = vmatprep.mubr.f32.mxu0 0.0
        %1207 = vmatmul.mubr.f32.gmra.mrb[0].mxu0 %v1105
        %v1208 = vpop.f32.mrb[0].mxu0
        %v1209 = vadd.f32 %v1080, %v1208
        %v1210 = vpop.f32.mrb[0].mxu0
        %1211 = vdwg.mxu0
        %v1212 = vld [vmem:[%s9] sm:$0x1]
        %v1214 = vlaneseq
        %v1215 = vshrl.u32 %v1214, 7
        %v1216 = vsub.s32 0, %v1215
        %v1217 = vrot.slane %v1212, %v1216
        %v1219 = vadd.f32 %v1174, %v1217
        %v1220 = vadd.f32 %v1179, %v1217
        %v1221 = vadd.f32 %v1184, %v1217
        %v1222 = vadd.f32 %v1189, %v1217
        %v1223 = vadd.f32 %v1194, %v1217
        %v1224 = vadd.f32 %v1199, %v1217
        %v1225 = vadd.f32 %v1204, %v1217
        %v1226 = vadd.f32 %v1209, %v1217
        %vm1227 = vcmask 785408
        %1228 = vst.msk [vmem:[#allocation2] sm:$0xff] %vm1227, %v1219
        %1229 = vst.msk [vmem:[#allocation2 + $0x8] sm:$0xff] %vm1227, %v1220
        %1230 = vst.msk [vmem:[#allocation2 + $0x10] sm:$0xff] %vm1227, %v1221
        %1231 = vst.msk [vmem:[#allocation2 + $0x18] sm:$0xff] %vm1227, %v1222
        %1232 = vst.msk [vmem:[#allocation2 + $0x20] sm:$0xff] %vm1227, %v1223
        %1233 = vst.msk [vmem:[#allocation2 + $0x28] sm:$0xff] %vm1227, %v1224
        %1234 = vst.msk [vmem:[#allocation2 + $0x30] sm:$0xff] %vm1227, %v1225
        %1235 = vst.msk [vmem:[#allocation2 + $0x38] sm:$0xff] %vm1227, %v1226
        %v1236 = vld [vmem:[#allocation16] sm:$0xff]
        %v1237 = vld [vmem:[#allocation16 + $0x8] sm:$0xff]
        %v1238 = vld [vmem:[#allocation16 + $0x10] sm:$0xff]
        %v1239 = vld [vmem:[#allocation16 + $0x18] sm:$0xff]
        %v1240 = vld [vmem:[%s11] sm:$0x1]
        %v1242 = vlaneseq
        %v1243 = vshrl.u32 %v1242, 7
        %v1244 = vsub.s32 0, %v1243
        %v1245 = vrot.slane %v1240, %v1244
        %v1247 = vld [vmem:[#allocation17] sm:$0xff]
        %v1248 = vld [vmem:[#allocation2] sm:$0xff]
        %v1250 = vsel %vm660, %v1247, 0
        %1252 = vmatprep.subr.mxu0 0.0
        %1253 = vmatpush1.msra.mxu0 %v1236
        %1254 = vmatprep.subr.mxu0 0.0
        %1255 = vmatpush1.msra.mxu0 %v1237
        %1256 = vmatprep.subr.mxu0 0.0
        %1257 = vmatpush1.msra.mxu0 %v1238
        %1258 = vmatprep.subr.mxu0 0.0
        %1259 = vmatpush1.msra.mxu0 %v1239
        %1260 = vmatprep.subr.mxu0 0.0
        %1261 = vmatpush1.msra.mxu0 0.0
        %1262 = vmatprep.subr.mxu0 0.0
        %1263 = vmatpush1.msra.mxu0 0.0
        %1264 = vmatprep.subr.mxu0 0.0
        %1265 = vmatpush1.msra.mxu0 0.0
        %1266 = vmatprep.subr.mxu0 0.0
        %1267 = vmatpush1.msra.mxu0 0.0
        %1268 = vmatprep.subr.mxu0 0.0
        %1269 = vmatpush1.msra.mxu0 0.0
        %1270 = vmatprep.subr.mxu0 0.0
        %1271 = vmatpush1.msra.mxu0 0.0
        %1272 = vmatprep.subr.mxu0 0.0
        %1273 = vmatpush1.msra.mxu0 0.0
        %1274 = vmatprep.subr.mxu0 0.0
        %1275 = vmatpush1.msra.mxu0 0.0
        %1276 = vmatprep.subr.mxu0 0.0
        %1277 = vmatpush1.msra.mxu0 0.0
        %1278 = vmatprep.subr.mxu0 0.0
        %1279 = vmatpush1.msra.mxu0 0.0
        %1280 = vmatprep.subr.mxu0 0.0
        %1281 = vmatpush1.msra.mxu0 0.0
        %1282 = vmatprep.subr.mxu0 0.0
        %1283 = vmatpush1.msra.mxu0 0.0
        %1284 = vmatprep.subr.mxu0 0.0
        %1285 = vmatpush1.msra.mxu0 0.0
        %1286 = vmatprep.subr.mxu0 0.0
        %1287 = vmatpush1.msra.mxu0 0.0
        %1288 = vmatprep.subr.mxu0 0.0
        %1289 = vmatpush1.msra.mxu0 0.0
        %1290 = vmatprep.subr.mxu0 0.0
        %1291 = vmatpush1.msra.mxu0 0.0
        %1292 = vmatprep.subr.mxu0 0.0
        %1293 = vmatpush1.msra.mxu0 0.0
        %1294 = vmatprep.subr.mxu0 0.0
        %1295 = vmatpush1.msra.mxu0 0.0
        %1296 = vmatprep.subr.mxu0 0.0
        %1297 = vmatpush1.msra.mxu0 0.0
        %1298 = vmatprep.subr.mxu0 0.0
        %1299 = vmatpush1.msra.mxu0 0.0
        %1300 = vmatprep.subr.mxu0 0.0
        %1301 = vmatpush1.msra.mxu0 0.0
        %1302 = vmatprep.subr.mxu0 0.0
        %1303 = vmatpush1.msra.mxu0 0.0
        %1304 = vmatprep.subr.mxu0 0.0
        %1305 = vmatpush1.msra.mxu0 0.0
        %1306 = vmatprep.subr.mxu0 0.0
        %1307 = vmatpush1.msra.mxu0 0.0
        %1308 = vmatprep.subr.mxu0 0.0
        %1309 = vmatpush1.msra.mxu0 0.0
        %1310 = vmatprep.subr.mxu0 0.0
        %1311 = vmatpush1.msra.mxu0 0.0
        %1312 = vmatprep.subr.mxu0 0.0
        %1313 = vmatpush1.msra.mxu0 0.0
        %1314 = vmatprep.subr.mxu0 0.0
        %1315 = vmatpush1.msra.mxu0 0.0
        %1316 = vmatprep.mubr.f32.mxu0 0.0
        %1317 = vmatmul.mubr.f32.gmra.mrb[0].mxu0 %v1250
        %v1318 = vpop.f32.mrb[0].mxu0
        %v1319 = vadd.f32 %v1245, %v1318
        %v1320 = vpop.f32.mrb[0].mxu0
        %1321 = vdwg.mxu0
        %v1322 = vadd.f32 %v1248, %v1319
        %v1323 = vxor.u32 %v1322, 2147483648
        %v1324 = vmul.f32 %v1323, 1.442695
        %v1325 = vpow.pop %v1324
        %v1326 = vadd.f32 %v1325, 1.0
        %v1327 = vrcp.pop %v1326
        %v1328 = vmul.f32 1.0, %v1327
        %1330 = vrot.lane.b32.xlu0 %v1319, 64
        %v1331 = vpop.permute.xlu0 %1330
        %v1333 = vmul.f32 %v1328, %v1331
        %1335 = vrot.lane.b32.xlu0 %v1333, 64
        %v1336 = vpop.permute.xlu0 %1335
        %v1338 = vadd.f32 %v1248, %v1336
        %v1339 = vtanh.pop %v1338
        %v1340 = vsub.f32 1.0, %v1328
        %1342 = vrot.lane.b32.xlu0 %v1339, 96
        %v1343 = vpop.permute.xlu0 %1342
        %v1345 = vmul.f32 %v1340, %v1343
        %1346 = vrot.lane.b32.xlu0 %v1247, 32
        %v1347 = vpop.permute.xlu0 %1346
        %v1349 = vmul.f32 %v1328, %v1347
        %v1350 = vadd.f32 %v1345, %v1349
        %1352 = vrot.lane.b32.xlu0 %v1350, 96
        %v1353 = vpop.permute.xlu0 %1352
        %1355 = vst.msk [vmem:[#allocation3] sm:$0xff] %vm660, %v1353
        %s1356 = scalar_lea.vmem [#allocation2], 8
        %v1357 = vld [vmem:[%s1356] sm:$0xff]
        %v1358 = vsel %vm660, %v1353, 0
        %1360 = vmatprep.subr.mxu0 0.0
        %1361 = vmatpush1.msra.mxu0 %v1236
        %1362 = vmatprep.subr.mxu0 0.0
        %1363 = vmatpush1.msra.mxu0 %v1237
        %1364 = vmatprep.subr.mxu0 0.0
        %1365 = vmatpush1.msra.mxu0 %v1238
        %1366 = vmatprep.subr.mxu0 0.0
        %1367 = vmatpush1.msra.mxu0 %v1239
        %1368 = vmatprep.subr.mxu0 0.0
        %1369 = vmatpush1.msra.mxu0 0.0
        %1370 = vmatprep.subr.mxu0 0.0
        %1371 = vmatpush1.msra.mxu0 0.0
        %1372 = vmatprep.subr.mxu0 0.0
        %1373 = vmatpush1.msra.mxu0 0.0
        %1374 = vmatprep.subr.mxu0 0.0
        %1375 = vmatpush1.msra.mxu0 0.0
        %1376 = vmatprep.subr.mxu0 0.0
        %1377 = vmatpush1.msra.mxu0 0.0
        %1378 = vmatprep.subr.mxu0 0.0
        %1379 = vmatpush1.msra.mxu0 0.0
        %1380 = vmatprep.subr.mxu0 0.0
        %1381 = vmatpush1.msra.mxu0 0.0
        %1382 = vmatprep.subr.mxu0 0.0
        %1383 = vmatpush1.msra.mxu0 0.0
        %1384 = vmatprep.subr.mxu0 0.0
        %1385 = vmatpush1.msra.mxu0 0.0
        %1386 = vmatprep.subr.mxu0 0.0
        %1387 = vmatpush1.msra.mxu0 0.0
        %1388 = vmatprep.subr.mxu0 0.0
        %1389 = vmatpush1.msra.mxu0 0.0
        %1390 = vmatprep.subr.mxu0 0.0
        %1391 = vmatpush1.msra.mxu0 0.0
        %1392 = vmatprep.subr.mxu0 0.0
        %1393 = vmatpush1.msra.mxu0 0.0
        %1394 = vmatprep.subr.mxu0 0.0
        %1395 = vmatpush1.msra.mxu0 0.0
        %1396 = vmatprep.subr.mxu0 0.0
        %1397 = vmatpush1.msra.mxu0 0.0
        %1398 = vmatprep.subr.mxu0 0.0
        %1399 = vmatpush1.msra.mxu0 0.0
        %1400 = vmatprep.subr.mxu0 0.0
        %1401 = vmatpush1.msra.mxu0 0.0
        %1402 = vmatprep.subr.mxu0 0.0
        %1403 = vmatpush1.msra.mxu0 0.0
        %1404 = vmatprep.subr.mxu0 0.0
        %1405 = vmatpush1.msra.mxu0 0.0
        %1406 = vmatprep.subr.mxu0 0.0
        %1407 = vmatpush1.msra.mxu0 0.0
        %1408 = vmatprep.subr.mxu0 0.0
        %1409 = vmatpush1.msra.mxu0 0.0
        %1410 = vmatprep.subr.mxu0 0.0
        %1411 = vmatpush1.msra.mxu0 0.0
        %1412 = vmatprep.subr.mxu0 0.0
        %1413 = vmatpush1.msra.mxu0 0.0
        %1414 = vmatprep.subr.mxu0 0.0
        %1415 = vmatpush1.msra.mxu0 0.0
        %1416 = vmatprep.subr.mxu0 0.0
        %1417 = vmatpush1.msra.mxu0 0.0
        %1418 = vmatprep.subr.mxu0 0.0
        %1419 = vmatpush1.msra.mxu0 0.0
        %1420 = vmatprep.subr.mxu0 0.0
        %1421 = vmatpush1.msra.mxu0 0.0
        %1422 = vmatprep.subr.mxu0 0.0
        %1423 = vmatpush1.msra.mxu0 0.0
        %1424 = vmatprep.mubr.f32.mxu0 0.0
        %1425 = vmatmul.mubr.f32.gmra.mrb[0].mxu0 %v1358
        %v1426 = vpop.f32.mrb[0].mxu0
        %v1427 = vadd.f32 %v1245, %v1426
        %v1428 = vpop.f32.mrb[0].mxu0
        %1429 = vdwg.mxu0
        %v1430 = vadd.f32 %v1357, %v1427
        %v1431 = vxor.u32 %v1430, 2147483648
        %v1432 = vmul.f32 %v1431, 1.442695
        %v1433 = vpow.pop %v1432
        %v1434 = vadd.f32 %v1433, 1.0
        %v1435 = vrcp.pop %v1434
        %v1436 = vmul.f32 1.0, %v1435
        %1438 = vrot.lane.b32.xlu0 %v1427, 64
        %v1439 = vpop.permute.xlu0 %1438
        %v1441 = vmul.f32 %v1436, %v1439
        %1443 = vrot.lane.b32.xlu0 %v1441, 64
        %v1444 = vpop.permute.xlu0 %1443
        %v1446 = vadd.f32 %v1357, %v1444
        %v1447 = vtanh.pop %v1446
        %v1448 = vsub.f32 1.0, %v1436
        %1450 = vrot.lane.b32.xlu0 %v1447, 96
        %v1451 = vpop.permute.xlu0 %1450
        %v1453 = vmul.f32 %v1448, %v1451
        %v1454 = vmul.f32 %v1436, %v1350
        %v1455 = vadd.f32 %v1453, %v1454
        %1457 = vrot.lane.b32.xlu0 %v1455, 96
        %v1458 = vpop.permute.xlu0 %1457
        %s1460 = scalar_lea.vmem [#allocation3], 8
        %1461 = vst.msk [vmem:[%s1460] sm:$0xff] %vm660, %v1458
        %s1462 = scalar_lea.vmem [#allocation2], 16
        %v1463 = vld [vmem:[%s1462] sm:$0xff]
        %v1464 = vsel %vm660, %v1458, 0
        %1466 = vmatprep.subr.mxu0 0.0
        %1467 = vmatpush1.msra.mxu0 %v1236
        %1468 = vmatprep.subr.mxu0 0.0
        %1469 = vmatpush1.msra.mxu0 %v1237
        %1470 = vmatprep.subr.mxu0 0.0
        %1471 = vmatpush1.msra.mxu0 %v1238
        %1472 = vmatprep.subr.mxu0 0.0
        %1473 = vmatpush1.msra.mxu0 %v1239
        %1474 = vmatprep.subr.mxu0 0.0
        %1475 = vmatpush1.msra.mxu0 0.0
        %1476 = vmatprep.subr.mxu0 0.0
        %1477 = vmatpush1.msra.mxu0 0.0
        %1478 = vmatprep.subr.mxu0 0.0
        %1479 = vmatpush1.msra.mxu0 0.0
        %1480 = vmatprep.subr.mxu0 0.0
        %1481 = vmatpush1.msra.mxu0 0.0
        %1482 = vmatprep.subr.mxu0 0.0
        %1483 = vmatpush1.msra.mxu0 0.0
        %1484 = vmatprep.subr.mxu0 0.0
        %1485 = vmatpush1.msra.mxu0 0.0
        %1486 = vmatprep.subr.mxu0 0.0
        %1487 = vmatpush1.msra.mxu0 0.0
        %1488 = vmatprep.subr.mxu0 0.0
        %1489 = vmatpush1.msra.mxu0 0.0
        %1490 = vmatprep.subr.mxu0 0.0
        %1491 = vmatpush1.msra.mxu0 0.0
        %1492 = vmatprep.subr.mxu0 0.0
        %1493 = vmatpush1.msra.mxu0 0.0
        %1494 = vmatprep.subr.mxu0 0.0
        %1495 = vmatpush1.msra.mxu0 0.0
        %1496 = vmatprep.subr.mxu0 0.0
        %1497 = vmatpush1.msra.mxu0 0.0
        %1498 = vmatprep.subr.mxu0 0.0
        %1499 = vmatpush1.msra.mxu0 0.0
        %1500 = vmatprep.subr.mxu0 0.0
        %1501 = vmatpush1.msra.mxu0 0.0
        %1502 = vmatprep.subr.mxu0 0.0
        %1503 = vmatpush1.msra.mxu0 0.0
        %1504 = vmatprep.subr.mxu0 0.0
        %1505 = vmatpush1.msra.mxu0 0.0
        %1506 = vmatprep.subr.mxu0 0.0
        %1507 = vmatpush1.msra.mxu0 0.0
        %1508 = vmatprep.subr.mxu0 0.0
        %1509 = vmatpush1.msra.mxu0 0.0
        %1510 = vmatprep.subr.mxu0 0.0
        %1511 = vmatpush1.msra.mxu0 0.0
        %1512 = vmatprep.subr.mxu0 0.0
        %1513 = vmatpush1.msra.mxu0 0.0
        %1514 = vmatprep.subr.mxu0 0.0
        %1515 = vmatpush1.msra.mxu0 0.0
        %1516 = vmatprep.subr.mxu0 0.0
        %1517 = vmatpush1.msra.mxu0 0.0
        %1518 = vmatprep.subr.mxu0 0.0
        %1519 = vmatpush1.msra.mxu0 0.0
        %1520 = vmatprep.subr.mxu0 0.0
        %1521 = vmatpush1.msra.mxu0 0.0
        %1522 = vmatprep.subr.mxu0 0.0
        %1523 = vmatpush1.msra.mxu0 0.0
        %1524 = vmatprep.subr.mxu0 0.0
        %1525 = vmatpush1.msra.mxu0 0.0
        %1526 = vmatprep.subr.mxu0 0.0
        %1527 = vmatpush1.msra.mxu0 0.0
        %1528 = vmatprep.subr.mxu0 0.0
        %1529 = vmatpush1.msra.mxu0 0.0
        %1530 = vmatprep.mubr.f32.mxu0 0.0
        %1531 = vmatmul.mubr.f32.gmra.mrb[0].mxu0 %v1464
        %v1532 = vpop.f32.mrb[0].mxu0
        %v1533 = vadd.f32 %v1245, %v1532
        %v1534 = vpop.f32.mrb[0].mxu0
        %1535 = vdwg.mxu0
        %v1536 = vadd.f32 %v1463, %v1533
        %v1537 = vxor.u32 %v1536, 2147483648
        %v1538 = vmul.f32 %v1537, 1.442695
        %v1539 = vpow.pop %v1538
        %v1540 = vadd.f32 %v1539, 1.0
        %v1541 = vrcp.pop %v1540
        %v1542 = vmul.f32 1.0, %v1541
        %1544 = vrot.lane.b32.xlu0 %v1533, 64
        %v1545 = vpop.permute.xlu0 %1544
        %v1547 = vmul.f32 %v1542, %v1545
        %1549 = vrot.lane.b32.xlu0 %v1547, 64
        %v1550 = vpop.permute.xlu0 %1549
        %v1552 = vadd.f32 %v1463, %v1550
        %v1553 = vtanh.pop %v1552
        %v1554 = vsub.f32 1.0, %v1542
        %1556 = vrot.lane.b32.xlu0 %v1553, 96
        %v1557 = vpop.permute.xlu0 %1556
        %v1559 = vmul.f32 %v1554, %v1557
        %v1560 = vmul.f32 %v1542, %v1455
        %v1561 = vadd.f32 %v1559, %v1560
        %1563 = vrot.lane.b32.xlu0 %v1561, 96
        %v1564 = vpop.permute.xlu0 %1563
        %s1566 = scalar_lea.vmem [#allocation3], 16
        %1567 = vst.msk [vmem:[%s1566] sm:$0xff] %vm660, %v1564
        %s1568 = scalar_lea.vmem [#allocation2], 24
        %v1569 = vld [vmem:[%s1568] sm:$0xff]
        %v1570 = vsel %vm660, %v1564, 0
        %1572 = vmatprep.subr.mxu0 0.0
        %1573 = vmatpush1.msra.mxu0 %v1236
        %1574 = vmatprep.subr.mxu0 0.0
        %1575 = vmatpush1.msra.mxu0 %v1237
        %1576 = vmatprep.subr.mxu0 0.0
        %1577 = vmatpush1.msra.mxu0 %v1238
        %1578 = vmatprep.subr.mxu0 0.0
        %1579 = vmatpush1.msra.mxu0 %v1239
        %1580 = vmatprep.subr.mxu0 0.0
        %1581 = vmatpush1.msra.mxu0 0.0
        %1582 = vmatprep.subr.mxu0 0.0
        %1583 = vmatpush1.msra.mxu0 0.0
        %1584 = vmatprep.subr.mxu0 0.0
        %1585 = vmatpush1.msra.mxu0 0.0
        %1586 = vmatprep.subr.mxu0 0.0
        %1587 = vmatpush1.msra.mxu0 0.0
        %1588 = vmatprep.subr.mxu0 0.0
        %1589 = vmatpush1.msra.mxu0 0.0
        %1590 = vmatprep.subr.mxu0 0.0
        %1591 = vmatpush1.msra.mxu0 0.0
        %1592 = vmatprep.subr.mxu0 0.0
        %1593 = vmatpush1.msra.mxu0 0.0
        %1594 = vmatprep.subr.mxu0 0.0
        %1595 = vmatpush1.msra.mxu0 0.0
        %1596 = vmatprep.subr.mxu0 0.0
        %1597 = vmatpush1.msra.mxu0 0.0
        %1598 = vmatprep.subr.mxu0 0.0
        %1599 = vmatpush1.msra.mxu0 0.0
        %1600 = vmatprep.subr.mxu0 0.0
        %1601 = vmatpush1.msra.mxu0 0.0
        %1602 = vmatprep.subr.mxu0 0.0
        %1603 = vmatpush1.msra.mxu0 0.0
        %1604 = vmatprep.subr.mxu0 0.0
        %1605 = vmatpush1.msra.mxu0 0.0
        %1606 = vmatprep.subr.mxu0 0.0
        %1607 = vmatpush1.msra.mxu0 0.0
        %1608 = vmatprep.subr.mxu0 0.0
        %1609 = vmatpush1.msra.mxu0 0.0
        %1610 = vmatprep.subr.mxu0 0.0
        %1611 = vmatpush1.msra.mxu0 0.0
        %1612 = vmatprep.subr.mxu0 0.0
        %1613 = vmatpush1.msra.mxu0 0.0
        %1614 = vmatprep.subr.mxu0 0.0
        %1615 = vmatpush1.msra.mxu0 0.0
        %1616 = vmatprep.subr.mxu0 0.0
        %1617 = vmatpush1.msra.mxu0 0.0
        %1618 = vmatprep.subr.mxu0 0.0
        %1619 = vmatpush1.msra.mxu0 0.0
        %1620 = vmatprep.subr.mxu0 0.0
        %1621 = vmatpush1.msra.mxu0 0.0
        %1622 = vmatprep.subr.mxu0 0.0
        %1623 = vmatpush1.msra.mxu0 0.0
        %1624 = vmatprep.subr.mxu0 0.0
        %1625 = vmatpush1.msra.mxu0 0.0
        %1626 = vmatprep.subr.mxu0 0.0
        %1627 = vmatpush1.msra.mxu0 0.0
        %1628 = vmatprep.subr.mxu0 0.0
        %1629 = vmatpush1.msra.mxu0 0.0
        %1630 = vmatprep.subr.mxu0 0.0
        %1631 = vmatpush1.msra.mxu0 0.0
        %1632 = vmatprep.subr.mxu0 0.0
        %1633 = vmatpush1.msra.mxu0 0.0
        %1634 = vmatprep.subr.mxu0 0.0
        %1635 = vmatpush1.msra.mxu0 0.0
        %1636 = vmatprep.mubr.f32.mxu0 0.0
        %1637 = vmatmul.mubr.f32.gmra.mrb[0].mxu0 %v1570
        %v1638 = vpop.f32.mrb[0].mxu0
        %v1639 = vadd.f32 %v1245, %v1638
        %v1640 = vpop.f32.mrb[0].mxu0
        %1641 = vdwg.mxu0
        %v1642 = vadd.f32 %v1569, %v1639
        %v1643 = vxor.u32 %v1642, 2147483648
        %v1644 = vmul.f32 %v1643, 1.442695
        %v1645 = vpow.pop %v1644
        %v1646 = vadd.f32 %v1645, 1.0
        %v1647 = vrcp.pop %v1646
        %v1648 = vmul.f32 1.0, %v1647
        %1650 = vrot.lane.b32.xlu0 %v1639, 64
        %v1651 = vpop.permute.xlu0 %1650
        %v1653 = vmul.f32 %v1648, %v1651
        %1655 = vrot.lane.b32.xlu0 %v1653, 64
        %v1656 = vpop.permute.xlu0 %1655
        %v1658 = vadd.f32 %v1569, %v1656
        %v1659 = vtanh.pop %v1658
        %v1660 = vsub.f32 1.0, %v1648
        %1662 = vrot.lane.b32.xlu0 %v1659, 96
        %v1663 = vpop.permute.xlu0 %1662
        %v1665 = vmul.f32 %v1660, %v1663
        %v1666 = vmul.f32 %v1648, %v1561
        %v1667 = vadd.f32 %v1665, %v1666
        %1669 = vrot.lane.b32.xlu0 %v1667, 96
        %v1670 = vpop.permute.xlu0 %1669
        %s1672 = scalar_lea.vmem [#allocation3], 24
        %1673 = vst.msk [vmem:[%s1672] sm:$0xff] %vm660, %v1670
        %s1674 = scalar_lea.vmem [#allocation2], 32
        %v1675 = vld [vmem:[%s1674] sm:$0xff]
        %v1676 = vsel %vm660, %v1670, 0
        %1678 = vmatprep.subr.mxu0 0.0
        %1679 = vmatpush1.msra.mxu0 %v1236
        %1680 = vmatprep.subr.mxu0 0.0
        %1681 = vmatpush1.msra.mxu0 %v1237
        %1682 = vmatprep.subr.mxu0 0.0
        %1683 = vmatpush1.msra.mxu0 %v1238
        %1684 = vmatprep.subr.mxu0 0.0
        %1685 = vmatpush1.msra.mxu0 %v1239
        %1686 = vmatprep.subr.mxu0 0.0
        %1687 = vmatpush1.msra.mxu0 0.0
        %1688 = vmatprep.subr.mxu0 0.0
        %1689 = vmatpush1.msra.mxu0 0.0
        %1690 = vmatprep.subr.mxu0 0.0
        %1691 = vmatpush1.msra.mxu0 0.0
        %1692 = vmatprep.subr.mxu0 0.0
        %1693 = vmatpush1.msra.mxu0 0.0
        %1694 = vmatprep.subr.mxu0 0.0
        %1695 = vmatpush1.msra.mxu0 0.0
        %1696 = vmatprep.subr.mxu0 0.0
        %1697 = vmatpush1.msra.mxu0 0.0
        %1698 = vmatprep.subr.mxu0 0.0
        %1699 = vmatpush1.msra.mxu0 0.0
        %1700 = vmatprep.subr.mxu0 0.0
        %1701 = vmatpush1.msra.mxu0 0.0
        %1702 = vmatprep.subr.mxu0 0.0
        %1703 = vmatpush1.msra.mxu0 0.0
        %1704 = vmatprep.subr.mxu0 0.0
        %1705 = vmatpush1.msra.mxu0 0.0
        %1706 = vmatprep.subr.mxu0 0.0
        %1707 = vmatpush1.msra.mxu0 0.0
        %1708 = vmatprep.subr.mxu0 0.0
        %1709 = vmatpush1.msra.mxu0 0.0
        %1710 = vmatprep.subr.mxu0 0.0
        %1711 = vmatpush1.msra.mxu0 0.0
        %1712 = vmatprep.subr.mxu0 0.0
        %1713 = vmatpush1.msra.mxu0 0.0
        %1714 = vmatprep.subr.mxu0 0.0
        %1715 = vmatpush1.msra.mxu0 0.0
        %1716 = vmatprep.subr.mxu0 0.0
        %1717 = vmatpush1.msra.mxu0 0.0
        %1718 = vmatprep.subr.mxu0 0.0
        %1719 = vmatpush1.msra.mxu0 0.0
        %1720 = vmatprep.subr.mxu0 0.0
        %1721 = vmatpush1.msra.mxu0 0.0
        %1722 = vmatprep.subr.mxu0 0.0
        %1723 = vmatpush1.msra.mxu0 0.0
        %1724 = vmatprep.subr.mxu0 0.0
        %1725 = vmatpush1.msra.mxu0 0.0
        %1726 = vmatprep.subr.mxu0 0.0
        %1727 = vmatpush1.msra.mxu0 0.0
        %1728 = vmatprep.subr.mxu0 0.0
        %1729 = vmatpush1.msra.mxu0 0.0
        %1730 = vmatprep.subr.mxu0 0.0
        %1731 = vmatpush1.msra.mxu0 0.0
        %1732 = vmatprep.subr.mxu0 0.0
        %1733 = vmatpush1.msra.mxu0 0.0
        %1734 = vmatprep.subr.mxu0 0.0
        %1735 = vmatpush1.msra.mxu0 0.0
        %1736 = vmatprep.subr.mxu0 0.0
        %1737 = vmatpush1.msra.mxu0 0.0
        %1738 = vmatprep.subr.mxu0 0.0
        %1739 = vmatpush1.msra.mxu0 0.0
        %1740 = vmatprep.subr.mxu0 0.0
        %1741 = vmatpush1.msra.mxu0 0.0
        %1742 = vmatprep.mubr.f32.mxu0 0.0
        %1743 = vmatmul.mubr.f32.gmra.mrb[0].mxu0 %v1676
        %v1744 = vpop.f32.mrb[0].mxu0
        %v1745 = vadd.f32 %v1245, %v1744
        %v1746 = vpop.f32.mrb[0].mxu0
        %1747 = vdwg.mxu0
        %v1748 = vadd.f32 %v1675, %v1745
        %v1749 = vxor.u32 %v1748, 2147483648
        %v1750 = vmul.f32 %v1749, 1.442695
        %v1751 = vpow.pop %v1750
        %v1752 = vadd.f32 %v1751, 1.0
        %v1753 = vrcp.pop %v1752
        %v1754 = vmul.f32 1.0, %v1753
        %1756 = vrot.lane.b32.xlu0 %v1745, 64
        %v1757 = vpop.permute.xlu0 %1756
        %v1759 = vmul.f32 %v1754, %v1757
        %1761 = vrot.lane.b32.xlu0 %v1759, 64
        %v1762 = vpop.permute.xlu0 %1761
        %v1764 = vadd.f32 %v1675, %v1762
        %v1765 = vtanh.pop %v1764
        %v1766 = vsub.f32 1.0, %v1754
        %1768 = vrot.lane.b32.xlu0 %v1765, 96
        %v1769 = vpop.permute.xlu0 %1768
        %v1771 = vmul.f32 %v1766, %v1769
        %v1772 = vmul.f32 %v1754, %v1667
        %v1773 = vadd.f32 %v1771, %v1772
        %1775 = vrot.lane.b32.xlu0 %v1773, 96
        %v1776 = vpop.permute.xlu0 %1775
        %s1778 = scalar_lea.vmem [#allocation3], 32
        %1779 = vst.msk [vmem:[%s1778] sm:$0xff] %vm660, %v1776
        %s1780 = scalar_lea.vmem [#allocation2], 40
        %v1781 = vld [vmem:[%s1780] sm:$0xff]
        %v1782 = vsel %vm660, %v1776, 0
        %1784 = vmatprep.subr.mxu0 0.0
        %1785 = vmatpush1.msra.mxu0 %v1236
        %1786 = vmatprep.subr.mxu0 0.0
        %1787 = vmatpush1.msra.mxu0 %v1237
        %1788 = vmatprep.subr.mxu0 0.0
        %1789 = vmatpush1.msra.mxu0 %v1238
        %1790 = vmatprep.subr.mxu0 0.0
        %1791 = vmatpush1.msra.mxu0 %v1239
        %1792 = vmatprep.subr.mxu0 0.0
        %1793 = vmatpush1.msra.mxu0 0.0
        %1794 = vmatprep.subr.mxu0 0.0
        %1795 = vmatpush1.msra.mxu0 0.0
        %1796 = vmatprep.subr.mxu0 0.0
        %1797 = vmatpush1.msra.mxu0 0.0
        %1798 = vmatprep.subr.mxu0 0.0
        %1799 = vmatpush1.msra.mxu0 0.0
        %1800 = vmatprep.subr.mxu0 0.0
        %1801 = vmatpush1.msra.mxu0 0.0
        %1802 = vmatprep.subr.mxu0 0.0
        %1803 = vmatpush1.msra.mxu0 0.0
        %1804 = vmatprep.subr.mxu0 0.0
        %1805 = vmatpush1.msra.mxu0 0.0
        %1806 = vmatprep.subr.mxu0 0.0
        %1807 = vmatpush1.msra.mxu0 0.0
        %1808 = vmatprep.subr.mxu0 0.0
        %1809 = vmatpush1.msra.mxu0 0.0
        %1810 = vmatprep.subr.mxu0 0.0
        %1811 = vmatpush1.msra.mxu0 0.0
        %1812 = vmatprep.subr.mxu0 0.0
        %1813 = vmatpush1.msra.mxu0 0.0
        %1814 = vmatprep.subr.mxu0 0.0
        %1815 = vmatpush1.msra.mxu0 0.0
        %1816 = vmatprep.subr.mxu0 0.0
        %1817 = vmatpush1.msra.mxu0 0.0
        %1818 = vmatprep.subr.mxu0 0.0
        %1819 = vmatpush1.msra.mxu0 0.0
        %1820 = vmatprep.subr.mxu0 0.0
        %1821 = vmatpush1.msra.mxu0 0.0
        %1822 = vmatprep.subr.mxu0 0.0
        %1823 = vmatpush1.msra.mxu0 0.0
        %1824 = vmatprep.subr.mxu0 0.0
        %1825 = vmatpush1.msra.mxu0 0.0
        %1826 = vmatprep.subr.mxu0 0.0
        %1827 = vmatpush1.msra.mxu0 0.0
        %1828 = vmatprep.subr.mxu0 0.0
        %1829 = vmatpush1.msra.mxu0 0.0
        %1830 = vmatprep.subr.mxu0 0.0
        %1831 = vmatpush1.msra.mxu0 0.0
        %1832 = vmatprep.subr.mxu0 0.0
        %1833 = vmatpush1.msra.mxu0 0.0
        %1834 = vmatprep.subr.mxu0 0.0
        %1835 = vmatpush1.msra.mxu0 0.0
        %1836 = vmatprep.subr.mxu0 0.0
        %1837 = vmatpush1.msra.mxu0 0.0
        %1838 = vmatprep.subr.mxu0 0.0
        %1839 = vmatpush1.msra.mxu0 0.0
        %1840 = vmatprep.subr.mxu0 0.0
        %1841 = vmatpush1.msra.mxu0 0.0
        %1842 = vmatprep.subr.mxu0 0.0
        %1843 = vmatpush1.msra.mxu0 0.0
        %1844 = vmatprep.subr.mxu0 0.0
        %1845 = vmatpush1.msra.mxu0 0.0
        %1846 = vmatprep.subr.mxu0 0.0
        %1847 = vmatpush1.msra.mxu0 0.0
        %1848 = vmatprep.mubr.f32.mxu0 0.0
        %1849 = vmatmul.mubr.f32.gmra.mrb[0].mxu0 %v1782
        %v1850 = vpop.f32.mrb[0].mxu0
        %v1851 = vadd.f32 %v1245, %v1850
        %v1852 = vpop.f32.mrb[0].mxu0
        %1853 = vdwg.mxu0
        %v1854 = vadd.f32 %v1781, %v1851
        %v1855 = vxor.u32 %v1854, 2147483648
        %v1856 = vmul.f32 %v1855, 1.442695
        %v1857 = vpow.pop %v1856
        %v1858 = vadd.f32 %v1857, 1.0
        %v1859 = vrcp.pop %v1858
        %v1860 = vmul.f32 1.0, %v1859
        %1862 = vrot.lane.b32.xlu0 %v1851, 64
        %v1863 = vpop.permute.xlu0 %1862
        %v1865 = vmul.f32 %v1860, %v1863
        %1867 = vrot.lane.b32.xlu0 %v1865, 64
        %v1868 = vpop.permute.xlu0 %1867
        %v1870 = vadd.f32 %v1781, %v1868
        %v1871 = vtanh.pop %v1870
        %v1872 = vsub.f32 1.0, %v1860
        %1874 = vrot.lane.b32.xlu0 %v1871, 96
        %v1875 = vpop.permute.xlu0 %1874
        %v1877 = vmul.f32 %v1872, %v1875
        %v1878 = vmul.f32 %v1860, %v1773
        %v1879 = vadd.f32 %v1877, %v1878
        %1881 = vrot.lane.b32.xlu0 %v1879, 96
        %v1882 = vpop.permute.xlu0 %1881
        %s1884 = scalar_lea.vmem [#allocation3], 40
        %1885 = vst.msk [vmem:[%s1884] sm:$0xff] %vm660, %v1882
        %s1886 = scalar_lea.vmem [#allocation2], 48
        %v1887 = vld [vmem:[%s1886] sm:$0xff]
        %v1888 = vsel %vm660, %v1882, 0
        %1890 = vmatprep.subr.mxu0 0.0
        %1891 = vmatpush1.msra.mxu0 %v1236
        %1892 = vmatprep.subr.mxu0 0.0
        %1893 = vmatpush1.msra.mxu0 %v1237
        %1894 = vmatprep.subr.mxu0 0.0
        %1895 = vmatpush1.msra.mxu0 %v1238
        %1896 = vmatprep.subr.mxu0 0.0
        %1897 = vmatpush1.msra.mxu0 %v1239
        %1898 = vmatprep.subr.mxu0 0.0
        %1899 = vmatpush1.msra.mxu0 0.0
        %1900 = vmatprep.subr.mxu0 0.0
        %1901 = vmatpush1.msra.mxu0 0.0
        %1902 = vmatprep.subr.mxu0 0.0
        %1903 = vmatpush1.msra.mxu0 0.0
        %1904 = vmatprep.subr.mxu0 0.0
        %1905 = vmatpush1.msra.mxu0 0.0
        %1906 = vmatprep.subr.mxu0 0.0
        %1907 = vmatpush1.msra.mxu0 0.0
        %1908 = vmatprep.subr.mxu0 0.0
        %1909 = vmatpush1.msra.mxu0 0.0
        %1910 = vmatprep.subr.mxu0 0.0
        %1911 = vmatpush1.msra.mxu0 0.0
        %1912 = vmatprep.subr.mxu0 0.0
        %1913 = vmatpush1.msra.mxu0 0.0
        %1914 = vmatprep.subr.mxu0 0.0
        %1915 = vmatpush1.msra.mxu0 0.0
        %1916 = vmatprep.subr.mxu0 0.0
        %1917 = vmatpush1.msra.mxu0 0.0
        %1918 = vmatprep.subr.mxu0 0.0
        %1919 = vmatpush1.msra.mxu0 0.0
        %1920 = vmatprep.subr.mxu0 0.0
        %1921 = vmatpush1.msra.mxu0 0.0
        %1922 = vmatprep.subr.mxu0 0.0
        %1923 = vmatpush1.msra.mxu0 0.0
        %1924 = vmatprep.subr.mxu0 0.0
        %1925 = vmatpush1.msra.mxu0 0.0
        %1926 = vmatprep.subr.mxu0 0.0
        %1927 = vmatpush1.msra.mxu0 0.0
        %1928 = vmatprep.subr.mxu0 0.0
        %1929 = vmatpush1.msra.mxu0 0.0
        %1930 = vmatprep.subr.mxu0 0.0
        %1931 = vmatpush1.msra.mxu0 0.0
        %1932 = vmatprep.subr.mxu0 0.0
        %1933 = vmatpush1.msra.mxu0 0.0
        %1934 = vmatprep.subr.mxu0 0.0
        %1935 = vmatpush1.msra.mxu0 0.0
        %1936 = vmatprep.subr.mxu0 0.0
        %1937 = vmatpush1.msra.mxu0 0.0
        %1938 = vmatprep.subr.mxu0 0.0
        %1939 = vmatpush1.msra.mxu0 0.0
        %1940 = vmatprep.subr.mxu0 0.0
        %1941 = vmatpush1.msra.mxu0 0.0
        %1942 = vmatprep.subr.mxu0 0.0
        %1943 = vmatpush1.msra.mxu0 0.0
        %1944 = vmatprep.subr.mxu0 0.0
        %1945 = vmatpush1.msra.mxu0 0.0
        %1946 = vmatprep.subr.mxu0 0.0
        %1947 = vmatpush1.msra.mxu0 0.0
        %1948 = vmatprep.subr.mxu0 0.0
        %1949 = vmatpush1.msra.mxu0 0.0
        %1950 = vmatprep.subr.mxu0 0.0
        %1951 = vmatpush1.msra.mxu0 0.0
        %1952 = vmatprep.subr.mxu0 0.0
        %1953 = vmatpush1.msra.mxu0 0.0
        %1954 = vmatprep.mubr.f32.mxu0 0.0
        %1955 = vmatmul.mubr.f32.gmra.mrb[0].mxu0 %v1888
        %v1956 = vpop.f32.mrb[0].mxu0
        %v1957 = vadd.f32 %v1245, %v1956
        %v1958 = vpop.f32.mrb[0].mxu0
        %1959 = vdwg.mxu0
        %v1960 = vadd.f32 %v1887, %v1957
        %v1961 = vxor.u32 %v1960, 2147483648
        %v1962 = vmul.f32 %v1961, 1.442695
        %v1963 = vpow.pop %v1962
        %v1964 = vadd.f32 %v1963, 1.0
        %v1965 = vrcp.pop %v1964
        %v1966 = vmul.f32 1.0, %v1965
        %1968 = vrot.lane.b32.xlu0 %v1957, 64
        %v1969 = vpop.permute.xlu0 %1968
        %v1971 = vmul.f32 %v1966, %v1969
        %1973 = vrot.lane.b32.xlu0 %v1971, 64
        %v1974 = vpop.permute.xlu0 %1973
        %v1976 = vadd.f32 %v1887, %v1974
        %v1977 = vtanh.pop %v1976
        %v1978 = vsub.f32 1.0, %v1966
        %1980 = vrot.lane.b32.xlu0 %v1977, 96
        %v1981 = vpop.permute.xlu0 %1980
        %v1983 = vmul.f32 %v1978, %v1981
        %v1984 = vmul.f32 %v1966, %v1879
        %v1985 = vadd.f32 %v1983, %v1984
        %1987 = vrot.lane.b32.xlu0 %v1985, 96
        %v1988 = vpop.permute.xlu0 %1987
        %s1990 = scalar_lea.vmem [#allocation3], 48
        %1991 = vst.msk [vmem:[%s1990] sm:$0xff] %vm660, %v1988
        %s1992 = scalar_lea.vmem [#allocation2], 56
        %v1993 = vld [vmem:[%s1992] sm:$0xff]
        %v1994 = vsel %vm660, %v1988, 0
        %1996 = vmatprep.subr.mxu0 0.0
        %1997 = vmatpush1.msra.mxu0 %v1236
        %1998 = vmatprep.subr.mxu0 0.0
        %1999 = vmatpush1.msra.mxu0 %v1237
        %2000 = vmatprep.subr.mxu0 0.0
        %2001 = vmatpush1.msra.mxu0 %v1238
        %2002 = vmatprep.subr.mxu0 0.0
        %2003 = vmatpush1.msra.mxu0 %v1239
        %2004 = vmatprep.subr.mxu0 0.0
        %2005 = vmatpush1.msra.mxu0 0.0
        %2006 = vmatprep.subr.mxu0 0.0
        %2007 = vmatpush1.msra.mxu0 0.0
        %2008 = vmatprep.subr.mxu0 0.0
        %2009 = vmatpush1.msra.mxu0 0.0
        %2010 = vmatprep.subr.mxu0 0.0
        %2011 = vmatpush1.msra.mxu0 0.0
        %2012 = vmatprep.subr.mxu0 0.0
        %2013 = vmatpush1.msra.mxu0 0.0
        %2014 = vmatprep.subr.mxu0 0.0
        %2015 = vmatpush1.msra.mxu0 0.0
        %2016 = vmatprep.subr.mxu0 0.0
        %2017 = vmatpush1.msra.mxu0 0.0
        %2018 = vmatprep.subr.mxu0 0.0
        %2019 = vmatpush1.msra.mxu0 0.0
        %2020 = vmatprep.subr.mxu0 0.0
        %2021 = vmatpush1.msra.mxu0 0.0
        %2022 = vmatprep.subr.mxu0 0.0
        %2023 = vmatpush1.msra.mxu0 0.0
        %2024 = vmatprep.subr.mxu0 0.0
        %2025 = vmatpush1.msra.mxu0 0.0
        %2026 = vmatprep.subr.mxu0 0.0
        %2027 = vmatpush1.msra.mxu0 0.0
        %2028 = vmatprep.subr.mxu0 0.0
        %2029 = vmatpush1.msra.mxu0 0.0
        %2030 = vmatprep.subr.mxu0 0.0
        %2031 = vmatpush1.msra.mxu0 0.0
        %2032 = vmatprep.subr.mxu0 0.0
        %2033 = vmatpush1.msra.mxu0 0.0
        %2034 = vmatprep.subr.mxu0 0.0
        %2035 = vmatpush1.msra.mxu0 0.0
        %2036 = vmatprep.subr.mxu0 0.0
        %2037 = vmatpush1.msra.mxu0 0.0
        %2038 = vmatprep.subr.mxu0 0.0
        %2039 = vmatpush1.msra.mxu0 0.0
        %2040 = vmatprep.subr.mxu0 0.0
        %2041 = vmatpush1.msra.mxu0 0.0
        %2042 = vmatprep.subr.mxu0 0.0
        %2043 = vmatpush1.msra.mxu0 0.0
        %2044 = vmatprep.subr.mxu0 0.0
        %2045 = vmatpush1.msra.mxu0 0.0
        %2046 = vmatprep.subr.mxu0 0.0
        %2047 = vmatpush1.msra.mxu0 0.0
        %2048 = vmatprep.subr.mxu0 0.0
        %2049 = vmatpush1.msra.mxu0 0.0
        %2050 = vmatprep.subr.mxu0 0.0
        %2051 = vmatpush1.msra.mxu0 0.0
        %2052 = vmatprep.subr.mxu0 0.0
        %2053 = vmatpush1.msra.mxu0 0.0
        %2054 = vmatprep.subr.mxu0 0.0
        %2055 = vmatpush1.msra.mxu0 0.0
        %2056 = vmatprep.subr.mxu0 0.0
        %2057 = vmatpush1.msra.mxu0 0.0
        %2058 = vmatprep.subr.mxu0 0.0
        %2059 = vmatpush1.msra.mxu0 0.0
        %2060 = vmatprep.mubr.f32.mxu0 0.0
        %2061 = vmatmul.mubr.f32.gmra.mrb[0].mxu0 %v1994
        %v2062 = vpop.f32.mrb[0].mxu0
        %v2063 = vadd.f32 %v1245, %v2062
        %v2064 = vpop.f32.mrb[0].mxu0
        %2065 = vdwg.mxu0
        %v2066 = vadd.f32 %v1993, %v2063
        %v2067 = vxor.u32 %v2066, 2147483648
        %v2068 = vmul.f32 %v2067, 1.442695
        %v2069 = vpow.pop %v2068
        %v2070 = vadd.f32 %v2069, 1.0
        %v2071 = vrcp.pop %v2070
        %v2072 = vmul.f32 1.0, %v2071
        %2074 = vrot.lane.b32.xlu0 %v2063, 64
        %v2075 = vpop.permute.xlu0 %2074
        %v2077 = vmul.f32 %v2072, %v2075
        %2079 = vrot.lane.b32.xlu0 %v2077, 64
        %v2080 = vpop.permute.xlu0 %2079
        %v2082 = vadd.f32 %v1993, %v2080
        %v2083 = vtanh.pop %v2082
        %v2084 = vsub.f32 1.0, %v2072
        %2086 = vrot.lane.b32.xlu0 %v2083, 96
        %v2087 = vpop.permute.xlu0 %2086
        %v2089 = vmul.f32 %v2084, %v2087
        %v2090 = vmul.f32 %v2072, %v1985
        %v2091 = vadd.f32 %v2089, %v2090
        %2093 = vrot.lane.b32.xlu0 %v2091, 96
        %v2094 = vpop.permute.xlu0 %2093
        %s2096 = scalar_lea.vmem [#allocation3], 56
        %2097 = vst.msk [vmem:[%s2096] sm:$0xff] %vm660, %v2094
        %2098 = vst.msk [vmem:[#allocation17] sm:$0xff] %vm660, %v2094
        %v2099 = vld [vmem:[#allocation3] sm:$0xff]
        %v2100 = vld [vmem:[#allocation3 + $0x8] sm:$0xff]
        %v2101 = vld [vmem:[#allocation3 + $0x10] sm:$0xff]
        %v2102 = vld [vmem:[#allocation3 + $0x18] sm:$0xff]
        %v2103 = vld [vmem:[#allocation3 + $0x20] sm:$0xff]
        %v2104 = vld [vmem:[#allocation3 + $0x28] sm:$0xff]
        %v2105 = vld [vmem:[#allocation3 + $0x30] sm:$0xff]
        %v2106 = vld [vmem:[#allocation3 + $0x38] sm:$0xff]
        %v2107 = vld [vmem:[%s12] sm:$0x1]
        %v2109 = vlaneseq
        %v2110 = vshrl.u32 %v2109, 7
        %v2111 = vsub.s32 0, %v2110
        %v2112 = vrot.slane %v2107, %v2111
        %v2114 = vmul.f32 %v2099, %v2112
        %v2115 = vmul.f32 %v2100, %v2112
        %v2116 = vmul.f32 %v2101, %v2112
        %v2117 = vmul.f32 %v2102, %v2112
        %v2118 = vmul.f32 %v2103, %v2112
        %v2119 = vmul.f32 %v2104, %v2112
        %v2120 = vmul.f32 %v2105, %v2112
        %v2121 = vmul.f32 %v2106, %v2112
        %v2122 = vsel %vm660, %v2114, 0.0
        %2123 = vadd.xlane.f32.xlu0 %v2122
        %v2124 = vpop.xlane.xlu0 %2123
        %v2125 = vsel %vm660, %v2115, 0.0
        %2126 = vadd.xlane.f32.xlu0 %v2125
        %v2127 = vpop.xlane.xlu0 %2126
        %v2128 = vsel %vm660, %v2116, 0.0
        %2129 = vadd.xlane.f32.xlu0 %v2128
        %v2130 = vpop.xlane.xlu0 %2129
        %v2131 = vsel %vm660, %v2117, 0.0
        %2132 = vadd.xlane.f32.xlu0 %v2131
        %v2133 = vpop.xlane.xlu0 %2132
        %v2134 = vsel %vm660, %v2118, 0.0
        %2135 = vadd.xlane.f32.xlu0 %v2134
        %v2136 = vpop.xlane.xlu0 %2135
        %v2137 = vsel %vm660, %v2119, 0.0
        %2138 = vadd.xlane.f32.xlu0 %v2137
        %v2139 = vpop.xlane.xlu0 %2138
        %v2140 = vsel %vm660, %v2120, 0.0
        %2141 = vadd.xlane.f32.xlu0 %v2140
        %v2142 = vpop.xlane.xlu0 %2141
        %v2143 = vsel %vm660, %v2121, 0.0
        %2144 = vadd.xlane.f32.xlu0 %v2143
        %v2145 = vpop.xlane.xlu0 %2144
        %v2146 = vld [vmem:[#allocation4] sm:$0x1]
        %v2148 = vlaneseq
        %v2149 = vshrl.u32 %v2148, 7
        %v2150 = vsub.s32 0, %v2149
        %v2151 = vrot.slane %v2146, %v2150
        %2152 = vset.pattern.permute.xlu0 0
        %2153 = vperm.xlu0 %2152, %v2151
        %v2154 = vpop.permute.xlu0 %2153
        %v2156 = vadd.f32 %v2124, %v2154
        %v2157 = vadd.f32 %v2127, %v2154
        %v2158 = vadd.f32 %v2130, %v2154
        %v2159 = vadd.f32 %v2133, %v2154
        %v2160 = vadd.f32 %v2136, %v2154
        %v2161 = vadd.f32 %v2139, %v2154
        %v2162 = vadd.f32 %v2142, %v2154
        %v2163 = vadd.f32 %v2145, %v2154
        %v2164 = vmax.f32 %v2156, 0.0
        %v2165 = vmax.f32 %v2157, 0.0
        %v2166 = vmax.f32 %v2158, 0.0
        %v2167 = vmax.f32 %v2159, 0.0
        %v2168 = vmax.f32 %v2160, 0.0
        %v2169 = vmax.f32 %v2161, 0.0
        %v2170 = vmax.f32 %v2162, 0.0
        %v2171 = vmax.f32 %v2163, 0.0
        %v2180 = vlaneseq
        %v2181 = vand.u32 %v2180, 127
        %v2182 = vlaneseq
        %v2183 = vshrl.u32 %v2182, 7
        %v2184 = vsub.s32 %v2181, %v2183
        %v2185 = vrot.slane %v2164, %v2184
        %v2186 = vlaneseq
        %v2187 = vshrl.u32 %v2186, 7
        %v2188 = vsub.s32 %v2181, %v2187
        %v2189 = vrot.slane %v2165, %v2188
        %v2190 = vlaneseq
        %v2191 = vshrl.u32 %v2190, 7
        %v2192 = vsub.s32 %v2181, %v2191
        %v2193 = vrot.slane %v2166, %v2192
        %v2194 = vlaneseq
        %v2195 = vshrl.u32 %v2194, 7
        %v2196 = vsub.s32 %v2181, %v2195
        %v2197 = vrot.slane %v2167, %v2196
        %v2198 = vlaneseq
        %v2199 = vshrl.u32 %v2198, 7
        %v2200 = vsub.s32 %v2181, %v2199
        %v2201 = vrot.slane %v2168, %v2200
        %v2202 = vlaneseq
        %v2203 = vshrl.u32 %v2202, 7
        %v2204 = vsub.s32 %v2181, %v2203
        %v2205 = vrot.slane %v2169, %v2204
        %v2206 = vlaneseq
        %v2207 = vshrl.u32 %v2206, 7
        %v2208 = vsub.s32 %v2181, %v2207
        %v2209 = vrot.slane %v2170, %v2208
        %v2210 = vlaneseq
        %v2211 = vshrl.u32 %v2210, 7
        %v2212 = vsub.s32 %v2181, %v2211
        %v2213 = vrot.slane %v2171, %v2212
        %vm2214 = vcmask 1041409
        %v2215 = vsel %vm2214, %v2189, %v2185
        %vm2216 = vcmask 1042434
        %v2217 = vsel %vm2216, %v2193, %v2215
        %vm2218 = vcmask 1043459
        %v2219 = vsel %vm2218, %v2197, %v2217
        %vm2220 = vcmask 1044484
        %v2221 = vsel %vm2220, %v2201, %v2219
        %vm2222 = vcmask 1045509
        %v2223 = vsel %vm2222, %v2205, %v2221
        %vm2224 = vcmask 1046534
        %v2225 = vsel %vm2224, %v2209, %v2223
        %vm2226 = vcmask 1047559
        %v2227 = vsel %vm2226, %v2213, %v2225
        %vm2229 = vcmask 64512
        %2230 = vst.msk [vmem:[%s625] sm:$0xff] %vm2229, %v2227
        %p2231 = scmp.lt.s32.totalorder %s38, 1
        %s2232 = scalar_select %p2231, %s38, 1
        %s2233 = smul.addr %s2232, 8
        %s2234 = scalar_lea.vmem %s14, %s2233
        // Predicated region
        $region109: #{tpu_custom_call.1} parent=75 // pred_check
          %p2235 = pneg %p360
        $region110: #{tpu_custom_call.1} parent=75 // pred_check_branch
          %2237 = sbr.rel (%p2235) target = $region112
        $region111: #{tpu_custom_call.1} parent=75 // pred_region
          _
        $region112: #{tpu_custom_call.1} parent=75 // pred_fallthru
          _
        // Predicated region
        $region113: #{tpu_custom_call.1} parent=75 // pred_check
          %p2238 = pneg %p381
        $region114: #{tpu_custom_call.1} parent=75 // pred_check_branch
          %2240 = sbr.rel (%p2238) target = $region116
        $region115: #{tpu_custom_call.1} parent=75 // pred_region
          %s2242 = ssub.s32 128, 128
          %2243 = vsyncadd [#allocation7], %s2242
          %s2245 = sshll.u32 [#allocation17], 4
          %s2246 = int_to_ptr.vmem [resolvable:$true] %s2245
          %2248 = dma.vmem_to_hbm [thread:$0]  %s2246, 128, %s15, [#allocation7]
        $region116: #{tpu_custom_call.1} parent=75 // pred_fallthru
          _
        // Predicated region
        $region117: #{tpu_custom_call.1} parent=75 // pred_check
          %p2249 = pneg %p381
        $region118: #{tpu_custom_call.1} parent=75 // pred_check_branch
          %2251 = sbr.rel (%p2249) target = $region120
        $region119: #{tpu_custom_call.1} parent=75 // pred_region
          %2252 = dma.done [#allocation7], 128
        $region120: #{tpu_custom_call.1} parent=75 // pred_fallthru
          _
      $region76: #{tpu_custom_call.1} parent=5 // pred_fallthru
        _
      %p2253 = scmp.le.s32.totalorder 2, %s33
      // Predicated region
      $region121: #{tpu_custom_call.1} parent=5 // pred_check
        %p2254 = pneg %p2253
      $region122: #{tpu_custom_call.1} parent=5 // pred_check_branch
        %2256 = sbr.rel (%p2254) target = $region124
      $region123: #{tpu_custom_call.1} parent=5 // pred_region
        %s2257 = ssub.s32 %s33, 2
        // Predicated region
        $region125: #{tpu_custom_call.1} parent=123 // pred_check
          %p2258 = pneg %p366
        $region126: #{tpu_custom_call.1} parent=123 // pred_check_branch
          %2260 = sbr.rel (%p2258) target = $region128
        $region127: #{tpu_custom_call.1} parent=123 // pred_region
          %p2261 = scmp.lt.s32.totalorder %s39, 1
          %s2262 = scalar_select %p2261, %s39, 1
          %s2263 = smul.addr %s2262, 8
          %s2264 = scalar_lea.vmem %s14, %s2263
        $region128: #{tpu_custom_call.1} parent=123 // pred_fallthru
          _
      $region124: #{tpu_custom_call.1} parent=5 // pred_fallthru
        _
    $region6: #{tpu_custom_call.1} parent=1 // loop_footer
      %s37 = sadd.s32 1, %s33
    $region7: #{tpu_custom_call.1} parent=1 // loop_footer_branch
      %32 = sbr.rel target = $region3
    $region8: #{tpu_custom_call.1} parent=1 // loop_exit
      _
    %2265 = vsyncpa [#allocation6], 1
    %s2266 = scalar_lea.sflag [#allocation6], 1
    %2267 = vsyncpa %s2266, 1
    %2268 = vsyncpa [#allocation9], 1
    %s2269 = scalar_lea.sflag [#allocation9], 1
    %2270 = vsyncpa %s2269, 1
    %2271 = vsyncpa [#allocation12], 1
    %2272 = vsyncpa [#allocation15], 1
    %2273 = vsyncpa [#allocation7], 1
    %s2274 = scalar_lea.sflag [#allocation7], 1
    %2275 = vsyncpa %s2274, 1

</llo_original>
